<compile_context>
chip_gen: v6e
topology: v6e:2x2x1
jax: 0.10.0
libtpu: 0.0.40
codegen_flags: <defaults>
</compile_context>

<pallas_src>
import math

import jax
import jax.numpy as jnp
from jax.experimental import pallas as pl
from jax.experimental.pallas import tpu as pltpu

# ---- problem constants (from the PyTorch script) ----------------------------
CRITIC_OBS = (20, 20, 7)
N_ACTIONS = 5
BATCH = 12
N_AGENTS = 3
KSUR = 2                                            # combine_state[2]: (B, A, 2, 7)
D_IN = CRITIC_OBS[0] + CRITIC_OBS[1] + N_ACTIONS    # 45
D_SUR = CRITIC_OBS[2]                               # 7
HID = 128                                           # hidden / attention feature width

D_SLAB = N_AGENTS * (D_IN + KSUR * D_SUR) + 1       # 178 (incl. constant-1 bias column)
N1 = N_AGENTS * HID                                 # 384  (fused layer-1 width)
N2 = N_AGENTS * KSUR * HID                          # 768  (fused output width)


def _critic_kernel(slab_ref, w_slab_ref, w2x_ref, out_ref):
    """Whole forward pass: two MXU dots + relu + add + one lane-dense store."""
    # layer-1 (all agents) AND layer-2 "sur + bias" contribution in one fused matmul
    pre = jnp.dot(slab_ref[...], w_slab_ref[...],
                  preferred_element_type=jnp.float32)              # (B, 1152)
    x = jnp.maximum(pre[:, :N1], 0.0)                              # (B, 384), tile-aligned slice
    out = jnp.dot(x, w2x_ref[...],
                  preferred_element_type=jnp.float32) + pre[:, N1:]
    out_ref[...] = out.astype(out_ref.dtype)                       # one (B, 768) store


def prepare_kernel_params(w1, b1, w2, b2):
    """One-time weight layout transform (outside the per-call hot path).

    Builds the two block-structured weight slabs described above; biases are folded in
    via the constant-1 column appended to the activation slab.
    """
    d0, d1, da, dsur = CRITIC_OBS[0], CRITIC_OBS[1], N_ACTIONS, D_SUR
    s1_off = N_AGENTS * d0                          # 60
    a_off = N_AGENTS * (d0 + d1)                    # 120
    sur_off = N_AGENTS * (d0 + d1 + da)             # 135
    ones_row = D_SLAB - 1                           # 177

    w_slab = jnp.zeros((D_SLAB, N1 + N2), jnp.float32)
    w2x = jnp.zeros((N1, N2), jnp.float32)

    for i in range(N_AGENTS):
        c1 = slice(i * HID, (i + 1) * HID)
        # layer-1 rows for agent i (matching the slab column layout)
        w_slab = w_slab.at[i * d0:(i + 1) * d0, c1].set(w1[i, :d0])
        w_slab = w_slab.at[s1_off + i * d1: s1_off + (i + 1) * d1, c1].set(w1[i, d0:d0 + d1])
        w_slab = w_slab.at[a_off + i * da: a_off + (i + 1) * da, c1].set(w1[i, d0 + d1:])
        w_slab = w_slab.at[ones_row, c1].set(b1[i])
        for k in range(KSUR):
            c2 = slice(N1 + (2 * i + k) * HID, N1 + (2 * i + k + 1) * HID)
            r = sur_off + (i * KSUR + k) * dsur
            # layer-2 "sur" block for (agent i, neighbour k) + bias row
            w_slab = w_slab.at[r:r + dsur, c2].set(w2[i, HID:])
            w_slab = w_slab.at[ones_row, c2].set(b2[i])
            # layer-2 weight on x_i, placed once per neighbour column block
            w2x = w2x.at[c1, (2 * i + k) * HID:(2 * i + k + 1) * HID].set(w2[i, :HID])
    return w_slab, w2x


@jax.jit
def critic_att_combine_forward(combine_state, combine_action, kparams):
    """Pallas forward. Returns (B, n_agents*2, 128), matching torch.cat(feats, dim=1)."""
    w_slab, w2x = kparams
    s0, s1, s2 = combine_state
    if isinstance(combine_action, (list, tuple)):    # PyTorch forward also accepts a list
        combine_action = jnp.stack(list(combine_action), axis=1)
    B, A = s0.shape[0], s0.shape[1]

    # single tiny activation slab: free contiguous reshapes + one ~8.5 KiB concat
    slab = jnp.concatenate(
        [s0.reshape(B, -1), s1.reshape(B, -1), combine_action.reshape(B, -1),
         s2.reshape(B, -1), jnp.ones((B, 1), s0.dtype)], axis=-1)          # (B, 178)

    flops = 2 * B * (D_SLAB * (N1 + N2) + N1 * N2)
    bytes_accessed = 4 * (B * D_SLAB + D_SLAB * (N1 + N2) + N1 * N2 + B * N2)

    vmem = pl.BlockSpec(memory_space=pltpu.MemorySpace.VMEM)   # full arrays resident in VMEM
    out = pl.pallas_call(
        _critic_kernel,
        out_shape=jax.ShapeDtypeStruct((B, N2), jnp.float32),
        in_specs=[vmem, vmem, vmem],
        out_specs=vmem,
        cost_estimate=pl.CostEstimate(flops=flops, transcendentals=0,
                                      bytes_accessed=bytes_accessed),
    )(slab, w_slab, w2x)

    # (B, 768) -> (B, 6, 128): free reshape, no transpose
    return out.reshape(B, A * KSUR, HID)


def _init_params(key):
    """Deterministic PyTorch-Linear-style uniform init, stacked over agents."""
    k1, k2, k3, k4 = jax.random.split(key, 4)
    bnd1 = 1.0 / math.sqrt(D_IN)
    bnd2 = 1.0 / math.sqrt(HID + D_SUR)
    w1 = jax.random.uniform(k1, (N_AGENTS, D_IN, HID), jnp.float32, -bnd1, bnd1)
    b1 = jax.random.uniform(k2, (N_AGENTS, HID), jnp.float32, -bnd1, bnd1)
    w2 = jax.random.uniform(k3, (N_AGENTS, HID + D_SUR, HID), jnp.float32, -bnd2, bnd2)
    b2 = jax.random.uniform(k4, (N_AGENTS, HID), jnp.float32, -bnd2, bnd2)
    return w1, b1, w2, b2


def _reference_forward(combine_state, combine_action, raw_params):
    """Pure-JAX reference of the intended forward pass (f32, highest precision)."""
    w1, b1, w2, b2 = raw_params
    s0, s1, s2 = combine_state
    B = s0.shape[0]
    hp = jax.lax.Precision.HIGHEST
    feats = []
    for i in range(N_AGENTS):
        obswact = jnp.concatenate([s0[:, i], s1[:, i], combine_action[:, i]], axis=1)
        x = jnp.maximum(jnp.dot(obswact, w1[i], precision=hp) + b1[i], 0.0)       # (B,128)
        comb = jnp.concatenate(
            [jnp.broadcast_to(x[:, None, :], (B, KSUR, HID)), s2[:, i]], axis=-1)
        y = jnp.einsum("bkd,dh->bkh", comb, w2[i], precision=hp) + b2[i]          # (B,2,128)
        feats.append(y)
    return jnp.concatenate(feats, axis=1)                                         # (B,6,128)


if __name__ == "__main__":
    root = jax.random.PRNGKey(0)
    k_s0, k_s1, k_s2, k_act, k_par = jax.random.split(root, 5)

    combine_state = [
        jax.random.uniform(k_s0, (BATCH, N_AGENTS, CRITIC_OBS[0]), jnp.float32),
        jax.random.uniform(k_s1, (BATCH, N_AGENTS, CRITIC_OBS[1]), jnp.float32),
        jax.random.uniform(k_s2, (BATCH, N_AGENTS, KSUR, CRITIC_OBS[2]), jnp.float32),
    ]
    combine_action = jax.random.uniform(k_act, (BATCH, N_AGENTS, N_ACTIONS), jnp.float32)

    raw_params = _init_params(k_par)
    kparams = prepare_kernel_params(*raw_params)

    out = critic_att_combine_forward(combine_state, combine_action, kparams)
    out = jax.block_until_ready(out)

    ref = _reference_forward(combine_state, combine_action, raw_params)
    assert out.shape == (BATCH, N_AGENTS * KSUR, HID), out.shape
    max_err = float(jnp.max(jnp.abs(out - ref)))
    assert jnp.allclose(out, ref, rtol=1e-5, atol=5e-5), max_err

    print("KERNEL_OK")
</pallas_src>

<mosaic_0001>
module attributes {stable_mosaic.version = 11 : i64} {
  func.func @_critic_kernel(%arg0: memref<12x178xf32, #tpu.memory_space<vmem>>, %arg1: memref<178x1152xf32, #tpu.memory_space<vmem>>, %arg2: memref<384x768xf32, #tpu.memory_space<vmem>>, %arg3: memref<12x768xf32, #tpu.memory_space<vmem>>) attributes {dimension_semantics = [], scalar_prefetch = 0 : i64, scratch_operands = 0 : i64, tpu.core_type = #tpu.core_type<tc>} {
    %c0 = arith.constant 0 : index
    %c0_0 = arith.constant 0 : index
    %0 = vector.load %arg0[%c0, %c0_0] : memref<12x178xf32, #tpu.memory_space<vmem>>, vector<12x178xf32>
    %c0_1 = arith.constant 0 : index
    %c0_2 = arith.constant 0 : index
    %1 = vector.load %arg1[%c0_1, %c0_2] : memref<178x1152xf32, #tpu.memory_space<vmem>>, vector<178x1152xf32>
    %cst = arith.constant dense<0.000000e+00> : vector<12x1152xf32>
    %2 = tpu.matmul %0, %1, %cst {dimension_numbers = #tpu.dot_dimension_numbers<[1], [0], [0], [1], [0, 0, 1, 1], [], []>} : vector<12x178xf32>, vector<178x1152xf32>, vector<12x1152xf32> -> vector<12x1152xf32>
    %3 = vector.extract_strided_slice %2 {offsets = [0, 0], sizes = [12, 384], strides = [1, 1]} : vector<12x1152xf32> to vector<12x384xf32>
    %cst_3 = arith.constant 0.000000e+00 : f32
    %4 = vector.broadcast %cst_3 : f32 to vector<12x384xf32>
    %5 = arith.maximumf %3, %4 : vector<12x384xf32>
    %c0_4 = arith.constant 0 : index
    %c0_5 = arith.constant 0 : index
    %6 = vector.load %arg2[%c0_4, %c0_5] : memref<384x768xf32, #tpu.memory_space<vmem>>, vector<384x768xf32>
    %cst_6 = arith.constant dense<0.000000e+00> : vector<12x768xf32>
    %7 = tpu.matmul %5, %6, %cst_6 {dimension_numbers = #tpu.dot_dimension_numbers<[1], [0], [0], [1], [0, 0, 1, 1], [], []>} : vector<12x384xf32>, vector<384x768xf32>, vector<12x768xf32> -> vector<12x768xf32>
    %8 = vector.extract_strided_slice %2 {offsets = [0, 384], sizes = [12, 768], strides = [1, 1]} : vector<12x1152xf32> to vector<12x768xf32>
    %9 = arith.addf %7, %8 : vector<12x768xf32>
    %c0_7 = arith.constant 0 : index
    %c0_8 = arith.constant 0 : index
    %10 = vector.load %arg3[%c0_7, %c0_8] : memref<12x768xf32, #tpu.memory_space<vmem>>, vector<12x768xf32>
    tpu.vector_store %arg3[%c0_7, %c0_8], %9 {strides = array<i32>} : memref<12x768xf32, #tpu.memory_space<vmem>>, vector<12x768xf32>,
    return
  }
}

</mosaic_0001>

<llo_original>
// kernel: critic_att_combine_forward.1
$region0: #{critic_att_combine_forward.1}
  #allocation0 [shape = 'u32[]', space=smem, size = 0x4, offset = 0x4, fixed_abs, tag = 'smem constant byte address 0x4 - core index']
  #allocation1 [shape = 'u32[144,128]{1,0:T(1,128)}', space=vmem, size = 0x12000, scoped, tag = 'internal scratch']
  %s0 = inlined_call_operand.vmem [shape: f32[12,178], index: 0, kind: input, shape index: {}]
  %s1 = inlined_call_operand.hbm [shape: f32[178,1152], index: 1, kind: input, shape index: {}]
  %s2 = inlined_call_operand.hbm [shape: f32[384,768], index: 2, kind: input, shape index: {}]
  %s3 = inlined_call_operand.vmem [shape: f32[12,768], index: 3, kind: output, shape index: {}]
  %s4 = sld [smem:[#allocation0]]
  $region30: #{critic_att_combine_forward.1} parent=0
    _
  %s6 = ssub.s32 1, %s4
  %s7 = scalar_select 0, %s6, %s4
  $region1: #{critic_att_combine_forward.1} parent=0
    #allocation2 [shape = 'u8[847872]{0}', space=vmem, size = 0xcf000, scoped, tag = 'input window, operand 1, single buffered']
    #allocation3 [shape = 's32[1]{0}', space=sflag, size = 0x4, scoped, tag = 'scoped memory for critic_att_combine_forward.1']
    #allocation4 [shape = 'u8[1179648]{0}', space=vmem, size = 0x120000, scoped, tag = 'input window, operand 2, single buffered']
    #allocation5 [shape = 's32[1]{0}', space=sflag, size = 0x4, scoped, tag = 'scoped memory for critic_att_combine_forward.1']
    %8 = vsyncpa [#allocation3], 0
    %9 = vsyncpa [#allocation5], 0
    // Predicated region
    $region2: #{critic_att_combine_forward.1} parent=1 // pred_check
      _
    $region3: #{critic_att_combine_forward.1} parent=1 // pred_check_branch
      %11 = sbr.rel (0) target = $region5
    $region4: #{critic_att_combine_forward.1} parent=1 // pred_region
      _
    $region5: #{critic_att_combine_forward.1} parent=1 // pred_fallthru
      _
    // Predicated region
    $region6: #{critic_att_combine_forward.1} parent=1 // pred_check
      _
    $region7: #{critic_att_combine_forward.1} parent=1 // pred_check_branch
      %13 = sbr.rel (0) target = $region9
    $region8: #{critic_att_combine_forward.1} parent=1 // pred_region
      %s15 = ssub.s32 26496, 26496
      %16 = vsyncadd [#allocation3], %s15
      %s17 = sshll.u32 [#allocation2], 4
      %s18 = int_to_ptr.vmem [resolvable:$true] %s17
      %23 = dma.hbm_to_vmem [thread:$0]  %s1, 26496, %s18, [#allocation3], 1152, 1152, 72
    $region9: #{critic_att_combine_forward.1} parent=1 // pred_fallthru
      _
    // Predicated region
    $region10: #{critic_att_combine_forward.1} parent=1 // pred_check
      _
    $region11: #{critic_att_combine_forward.1} parent=1 // pred_check_branch
      %25 = sbr.rel (0) target = $region13
    $region12: #{critic_att_combine_forward.1} parent=1 // pred_region
      %s27 = ssub.s32 36864, 36864
      %28 = vsyncadd [#allocation5], %s27
      %s29 = sshll.u32 [#allocation4], 4
      %s30 = int_to_ptr.vmem [resolvable:$true] %s29
      %35 = dma.hbm_to_vmem [thread:$0]  %s2, 36864, %s30, [#allocation5], 768, 768, 48
    $region13: #{critic_att_combine_forward.1} parent=1 // pred_fallthru
      _
    // Predicated region
    $region14: #{critic_att_combine_forward.1} parent=1 // pred_check
      _
    $region15: #{critic_att_combine_forward.1} parent=1 // pred_check_branch
      %37 = sbr.rel (0) target = $region17
    $region16: #{critic_att_combine_forward.1} parent=1 // pred_region
      %38 = dma.done [#allocation3], 26496
    $region17: #{critic_att_combine_forward.1} parent=1 // pred_fallthru
      _
    // Predicated region
    $region18: #{critic_att_combine_forward.1} parent=1 // pred_check
      _
    $region19: #{critic_att_combine_forward.1} parent=1 // pred_check_branch
      %40 = sbr.rel (0) target = $region21
    $region20: #{critic_att_combine_forward.1} parent=1 // pred_region
      %41 = dma.done [#allocation5], 36864
    $region21: #{critic_att_combine_forward.1} parent=1 // pred_fallthru
      _
    %v42 = vld [vmem:[%s0] sm:$0xff]
    %v43 = vld [vmem:[%s0 + $0x8] sm:$0xff]
    %v44 = vld [vmem:[%s0 + $0x10] sm:$0xf]
    %v45 = vld [vmem:[%s0 + $0x18] sm:$0xf]
    %v46 = vld [vmem:[#allocation2] sm:$0xff]
    %v47 = vld [vmem:[#allocation2 + $0x8] sm:$0xff]
    %v48 = vld [vmem:[#allocation2 + $0x10] sm:$0xff]
    %v49 = vld [vmem:[#allocation2 + $0x18] sm:$0xff]
    %v50 = vld [vmem:[#allocation2 + $0x20] sm:$0xff]
    %v51 = vld [vmem:[#allocation2 + $0x28] sm:$0xff]
    %v52 = vld [vmem:[#allocation2 + $0x30] sm:$0xff]
    %v53 = vld [vmem:[#allocation2 + $0x38] sm:$0xff]
    %v54 = vld [vmem:[#allocation2 + $0x40] sm:$0xff]
    %v55 = vld [vmem:[#allocation2 + $0x48] sm:$0xff]
    %v56 = vld [vmem:[#allocation2 + $0x50] sm:$0xff]
    %v57 = vld [vmem:[#allocation2 + $0x58] sm:$0xff]
    %v58 = vld [vmem:[#allocation2 + $0x60] sm:$0xff]
    %v59 = vld [vmem:[#allocation2 + $0x68] sm:$0xff]
    %v60 = vld [vmem:[#allocation2 + $0x70] sm:$0xff]
    %v61 = vld [vmem:[#allocation2 + $0x78] sm:$0xff]
    %v62 = vld [vmem:[#allocation2 + $0x80] sm:$0xff]
    %v63 = vld [vmem:[#allocation2 + $0x88] sm:$0xff]
    %v64 = vld [vmem:[#allocation2 + $0x90] sm:$0xff]
    %v65 = vld [vmem:[#allocation2 + $0x98] sm:$0xff]
    %v66 = vld [vmem:[#allocation2 + $0xa0] sm:$0xff]
    %v67 = vld [vmem:[#allocation2 + $0xa8] sm:$0xff]
    %v68 = vld [vmem:[#allocation2 + $0xb0] sm:$0xff]
    %v69 = vld [vmem:[#allocation2 + $0xb8] sm:$0xff]
    %v70 = vld [vmem:[#allocation2 + $0xc0] sm:$0xff]
    %v71 = vld [vmem:[#allocation2 + $0xc8] sm:$0xff]
    %v72 = vld [vmem:[#allocation2 + $0xd0] sm:$0xff]
    %v73 = vld [vmem:[#allocation2 + $0xd8] sm:$0xff]
    %v74 = vld [vmem:[#allocation2 + $0xe0] sm:$0xff]
    %v75 = vld [vmem:[#allocation2 + $0xe8] sm:$0xff]
    %v76 = vld [vmem:[#allocation2 + $0xf0] sm:$0xff]
    %v77 = vld [vmem:[#allocation2 + $0xf8] sm:$0xff]
    %v78 = vld [vmem:[#allocation2 + $0x100] sm:$0xff]
    %v79 = vld [vmem:[#allocation2 + $0x108] sm:$0xff]
    %v80 = vld [vmem:[#allocation2 + $0x110] sm:$0xff]
    %v81 = vld [vmem:[#allocation2 + $0x118] sm:$0xff]
    %v82 = vld [vmem:[#allocation2 + $0x120] sm:$0xff]
    %v83 = vld [vmem:[#allocation2 + $0x128] sm:$0xff]
    %v84 = vld [vmem:[#allocation2 + $0x130] sm:$0xff]
    %v85 = vld [vmem:[#allocation2 + $0x138] sm:$0xff]
    %v86 = vld [vmem:[#allocation2 + $0x140] sm:$0xff]
    %v87 = vld [vmem:[#allocation2 + $0x148] sm:$0xff]
    %v88 = vld [vmem:[#allocation2 + $0x150] sm:$0xff]
    %v89 = vld [vmem:[#allocation2 + $0x158] sm:$0xff]
    %v90 = vld [vmem:[#allocation2 + $0x160] sm:$0xff]
    %v91 = vld [vmem:[#allocation2 + $0x168] sm:$0xff]
    %v92 = vld [vmem:[#allocation2 + $0x170] sm:$0xff]
    %v93 = vld [vmem:[#allocation2 + $0x178] sm:$0xff]
    %v94 = vld [vmem:[#allocation2 + $0x180] sm:$0xff]
    %v95 = vld [vmem:[#allocation2 + $0x188] sm:$0xff]
    %v96 = vld [vmem:[#allocation2 + $0x190] sm:$0xff]
    %v97 = vld [vmem:[#allocation2 + $0x198] sm:$0xff]
    %v98 = vld [vmem:[#allocation2 + $0x1a0] sm:$0xff]
    %v99 = vld [vmem:[#allocation2 + $0x1a8] sm:$0xff]
    %v100 = vld [vmem:[#allocation2 + $0x1b0] sm:$0xff]
    %v101 = vld [vmem:[#allocation2 + $0x1b8] sm:$0xff]
    %v102 = vld [vmem:[#allocation2 + $0x1c0] sm:$0xff]
    %v103 = vld [vmem:[#allocation2 + $0x1c8] sm:$0xff]
    %v104 = vld [vmem:[#allocation2 + $0x1d0] sm:$0xff]
    %v105 = vld [vmem:[#allocation2 + $0x1d8] sm:$0xff]
    %v106 = vld [vmem:[#allocation2 + $0x1e0] sm:$0xff]
    %v107 = vld [vmem:[#allocation2 + $0x1e8] sm:$0xff]
    %v108 = vld [vmem:[#allocation2 + $0x1f0] sm:$0xff]
    %v109 = vld [vmem:[#allocation2 + $0x1f8] sm:$0xff]
    %v110 = vld [vmem:[#allocation2 + $0x200] sm:$0xff]
    %v111 = vld [vmem:[#allocation2 + $0x208] sm:$0xff]
    %v112 = vld [vmem:[#allocation2 + $0x210] sm:$0xff]
    %v113 = vld [vmem:[#allocation2 + $0x218] sm:$0xff]
    %v114 = vld [vmem:[#allocation2 + $0x220] sm:$0xff]
    %v115 = vld [vmem:[#allocation2 + $0x228] sm:$0xff]
    %v116 = vld [vmem:[#allocation2 + $0x230] sm:$0xff]
    %v117 = vld [vmem:[#allocation2 + $0x238] sm:$0xff]
    %v118 = vld [vmem:[#allocation2 + $0x240] sm:$0xff]
    %v119 = vld [vmem:[#allocation2 + $0x248] sm:$0xff]
    %v120 = vld [vmem:[#allocation2 + $0x250] sm:$0xff]
    %v121 = vld [vmem:[#allocation2 + $0x258] sm:$0xff]
    %v122 = vld [vmem:[#allocation2 + $0x260] sm:$0xff]
    %v123 = vld [vmem:[#allocation2 + $0x268] sm:$0xff]
    %v124 = vld [vmem:[#allocation2 + $0x270] sm:$0xff]
    %v125 = vld [vmem:[#allocation2 + $0x278] sm:$0xff]
    %v126 = vld [vmem:[#allocation2 + $0x280] sm:$0xff]
    %v127 = vld [vmem:[#allocation2 + $0x288] sm:$0xff]
    %v128 = vld [vmem:[#allocation2 + $0x290] sm:$0xff]
    %v129 = vld [vmem:[#allocation2 + $0x298] sm:$0xff]
    %v130 = vld [vmem:[#allocation2 + $0x2a0] sm:$0xff]
    %v131 = vld [vmem:[#allocation2 + $0x2a8] sm:$0xff]
    %v132 = vld [vmem:[#allocation2 + $0x2b0] sm:$0xff]
    %v133 = vld [vmem:[#allocation2 + $0x2b8] sm:$0xff]
    %v134 = vld [vmem:[#allocation2 + $0x2c0] sm:$0xff]
    %v135 = vld [vmem:[#allocation2 + $0x2c8] sm:$0xff]
    %v136 = vld [vmem:[#allocation2 + $0x2d0] sm:$0xff]
    %v137 = vld [vmem:[#allocation2 + $0x2d8] sm:$0xff]
    %v138 = vld [vmem:[#allocation2 + $0x2e0] sm:$0xff]
    %v139 = vld [vmem:[#allocation2 + $0x2e8] sm:$0xff]
    %v140 = vld [vmem:[#allocation2 + $0x2f0] sm:$0xff]
    %v141 = vld [vmem:[#allocation2 + $0x2f8] sm:$0xff]
    %v142 = vld [vmem:[#allocation2 + $0x300] sm:$0xff]
    %v143 = vld [vmem:[#allocation2 + $0x308] sm:$0xff]
    %v144 = vld [vmem:[#allocation2 + $0x310] sm:$0xff]
    %v145 = vld [vmem:[#allocation2 + $0x318] sm:$0xff]
    %v146 = vld [vmem:[#allocation2 + $0x320] sm:$0xff]
    %v147 = vld [vmem:[#allocation2 + $0x328] sm:$0xff]
    %v148 = vld [vmem:[#allocation2 + $0x330] sm:$0xff]
    %v149 = vld [vmem:[#allocation2 + $0x338] sm:$0xff]
    %v150 = vld [vmem:[#allocation2 + $0x340] sm:$0xff]
    %v151 = vld [vmem:[#allocation2 + $0x348] sm:$0xff]
    %v152 = vld [vmem:[#allocation2 + $0x350] sm:$0xff]
    %v153 = vld [vmem:[#allocation2 + $0x358] sm:$0xff]
    %v154 = vld [vmem:[#allocation2 + $0x360] sm:$0xff]
    %v155 = vld [vmem:[#allocation2 + $0x368] sm:$0xff]
    %v156 = vld [vmem:[#allocation2 + $0x370] sm:$0xff]
    %v157 = vld [vmem:[#allocation2 + $0x378] sm:$0xff]
    %v158 = vld [vmem:[#allocation2 + $0x380] sm:$0xff]
    %v159 = vld [vmem:[#allocation2 + $0x388] sm:$0xff]
    %v160 = vld [vmem:[#allocation2 + $0x390] sm:$0xff]
    %v161 = vld [vmem:[#allocation2 + $0x398] sm:$0xff]
    %v162 = vld [vmem:[#allocation2 + $0x3a0] sm:$0xff]
    %v163 = vld [vmem:[#allocation2 + $0x3a8] sm:$0xff]
    %v164 = vld [vmem:[#allocation2 + $0x3b0] sm:$0xff]
    %v165 = vld [vmem:[#allocation2 + $0x3b8] sm:$0xff]
    %v166 = vld [vmem:[#allocation2 + $0x3c0] sm:$0xff]
    %v167 = vld [vmem:[#allocation2 + $0x3c8] sm:$0xff]
    %v168 = vld [vmem:[#allocation2 + $0x3d0] sm:$0xff]
    %v169 = vld [vmem:[#allocation2 + $0x3d8] sm:$0xff]
    %v170 = vld [vmem:[#allocation2 + $0x3e0] sm:$0xff]
    %v171 = vld [vmem:[#allocation2 + $0x3e8] sm:$0xff]
    %v172 = vld [vmem:[#allocation2 + $0x3f0] sm:$0xff]
    %v173 = vld [vmem:[#allocation2 + $0x3f8] sm:$0xff]
    %v174 = vld [vmem:[#allocation2 + $0x400] sm:$0xff]
    %v175 = vld [vmem:[#allocation2 + $0x408] sm:$0xff]
    %v176 = vld [vmem:[#allocation2 + $0x410] sm:$0xff]
    %v177 = vld [vmem:[#allocation2 + $0x418] sm:$0xff]
    %v178 = vld [vmem:[#allocation2 + $0x420] sm:$0xff]
    %v179 = vld [vmem:[#allocation2 + $0x428] sm:$0xff]
    %v180 = vld [vmem:[#allocation2 + $0x430] sm:$0xff]
    %v181 = vld [vmem:[#allocation2 + $0x438] sm:$0xff]
    %v182 = vld [vmem:[#allocation2 + $0x440] sm:$0xff]
    %v183 = vld [vmem:[#allocation2 + $0x448] sm:$0xff]
    %v184 = vld [vmem:[#allocation2 + $0x450] sm:$0xff]
    %v185 = vld [vmem:[#allocation2 + $0x458] sm:$0xff]
    %v186 = vld [vmem:[#allocation2 + $0x460] sm:$0xff]
    %v187 = vld [vmem:[#allocation2 + $0x468] sm:$0xff]
    %v188 = vld [vmem:[#allocation2 + $0x470] sm:$0xff]
    %v189 = vld [vmem:[#allocation2 + $0x478] sm:$0xff]
    %v190 = vld [vmem:[#allocation2 + $0x480] sm:$0xff]
    %v191 = vld [vmem:[#allocation2 + $0x488] sm:$0xff]
    %v192 = vld [vmem:[#allocation2 + $0x490] sm:$0xff]
    %v193 = vld [vmem:[#allocation2 + $0x498] sm:$0xff]
    %v194 = vld [vmem:[#allocation2 + $0x4a0] sm:$0xff]
    %v195 = vld [vmem:[#allocation2 + $0x4a8] sm:$0xff]
    %v196 = vld [vmem:[#allocation2 + $0x4b0] sm:$0xff]
    %v197 = vld [vmem:[#allocation2 + $0x4b8] sm:$0xff]
    %v198 = vld [vmem:[#allocation2 + $0x4c0] sm:$0xff]
    %v199 = vld [vmem:[#allocation2 + $0x4c8] sm:$0xff]
    %v200 = vld [vmem:[#allocation2 + $0x4d0] sm:$0xff]
    %v201 = vld [vmem:[#allocation2 + $0x4d8] sm:$0xff]
    %v202 = vld [vmem:[#allocation2 + $0x4e0] sm:$0xff]
    %v203 = vld [vmem:[#allocation2 + $0x4e8] sm:$0xff]
    %v204 = vld [vmem:[#allocation2 + $0x4f0] sm:$0xff]
    %v205 = vld [vmem:[#allocation2 + $0x4f8] sm:$0xff]
    %v206 = vld [vmem:[#allocation2 + $0x500] sm:$0xff]
    %v207 = vld [vmem:[#allocation2 + $0x508] sm:$0xff]
    %v208 = vld [vmem:[#allocation2 + $0x510] sm:$0xff]
    %v209 = vld [vmem:[#allocation2 + $0x518] sm:$0xff]
    %v210 = vld [vmem:[#allocation2 + $0x520] sm:$0xff]
    %v211 = vld [vmem:[#allocation2 + $0x528] sm:$0xff]
    %v212 = vld [vmem:[#allocation2 + $0x530] sm:$0xff]
    %v213 = vld [vmem:[#allocation2 + $0x538] sm:$0xff]
    %v214 = vld [vmem:[#allocation2 + $0x540] sm:$0xff]
    %v215 = vld [vmem:[#allocation2 + $0x548] sm:$0xff]
    %v216 = vld [vmem:[#allocation2 + $0x550] sm:$0xff]
    %v217 = vld [vmem:[#allocation2 + $0x558] sm:$0xff]
    %v218 = vld [vmem:[#allocation2 + $0x560] sm:$0xff]
    %v219 = vld [vmem:[#allocation2 + $0x568] sm:$0xff]
    %v220 = vld [vmem:[#allocation2 + $0x570] sm:$0xff]
    %v221 = vld [vmem:[#allocation2 + $0x578] sm:$0xff]
    %v222 = vld [vmem:[#allocation2 + $0x580] sm:$0xff]
    %v223 = vld [vmem:[#allocation2 + $0x588] sm:$0xff]
    %v224 = vld [vmem:[#allocation2 + $0x590] sm:$0xff]
    %v225 = vld [vmem:[#allocation2 + $0x598] sm:$0xff]
    %v226 = vld [vmem:[#allocation2 + $0x5a0] sm:$0xff]
    %v227 = vld [vmem:[#allocation2 + $0x5a8] sm:$0xff]
    %v228 = vld [vmem:[#allocation2 + $0x5b0] sm:$0xff]
    %v229 = vld [vmem:[#allocation2 + $0x5b8] sm:$0xff]
    %v230 = vld [vmem:[#allocation2 + $0x5c0] sm:$0xff]
    %v231 = vld [vmem:[#allocation2 + $0x5c8] sm:$0xff]
    %v232 = vld [vmem:[#allocation2 + $0x5d0] sm:$0xff]
    %v233 = vld [vmem:[#allocation2 + $0x5d8] sm:$0xff]
    %v234 = vld [vmem:[#allocation2 + $0x5e0] sm:$0xff]
    %v235 = vld [vmem:[#allocation2 + $0x5e8] sm:$0xff]
    %v236 = vld [vmem:[#allocation2 + $0x5f0] sm:$0xff]
    %v237 = vld [vmem:[#allocation2 + $0x5f8] sm:$0xff]
    %v238 = vld [vmem:[#allocation2 + $0x600] sm:$0xff]
    %v239 = vld [vmem:[#allocation2 + $0x608] sm:$0xff]
    %v240 = vld [vmem:[#allocation2 + $0x610] sm:$0xff]
    %v241 = vld [vmem:[#allocation2 + $0x618] sm:$0xff]
    %v242 = vld [vmem:[#allocation2 + $0x620] sm:$0xff]
    %v243 = vld [vmem:[#allocation2 + $0x628] sm:$0xff]
    %v244 = vld [vmem:[#allocation2 + $0x630] sm:$0x3]
    %v245 = vld [vmem:[#allocation2 + $0x638] sm:$0x3]
    %v246 = vld [vmem:[#allocation2 + $0x640] sm:$0x3]
    %v247 = vld [vmem:[#allocation2 + $0x648] sm:$0x3]
    %v248 = vld [vmem:[#allocation2 + $0x650] sm:$0x3]
    %v249 = vld [vmem:[#allocation2 + $0x658] sm:$0x3]
    %v250 = vld [vmem:[#allocation2 + $0x660] sm:$0x3]
    %v251 = vld [vmem:[#allocation2 + $0x668] sm:$0x3]
    %v252 = vld [vmem:[#allocation2 + $0x670] sm:$0x3]
    %vm253 = vcmask 408576
    %v255 = vsel %vm253, %v43, 0
    %v258 = vsel %vm253, %v45, 0
    %vm260 = vcmask 1041408
    %v262 = vsel %vm260, %v244, 0
    %v265 = vsel %vm260, %v245, 0
    %v268 = vsel %vm260, %v246, 0
    %v271 = vsel %vm260, %v247, 0
    %v274 = vsel %vm260, %v248, 0
    %v277 = vsel %vm260, %v249, 0
    %v280 = vsel %vm260, %v250, 0
    %v283 = vsel %vm260, %v251, 0
    %v286 = vsel %vm260, %v252, 0
    %288 = vmatprep.subr.mxu0 %v182
    %289 = vmatpush1.msra.mxu0 %v181
    %290 = vmatprep.subr.mxu0 %v173
    %291 = vmatpush1.msra.mxu0 %v172
    %292 = vmatprep.subr.mxu0 %v164
    %293 = vmatpush1.msra.mxu0 %v163
    %294 = vmatprep.subr.mxu0 %v155
    %295 = vmatpush1.msra.mxu0 %v154
    %296 = vmatprep.subr.mxu0 %v146
    %297 = vmatpush1.msra.mxu0 %v145
    %298 = vmatprep.subr.mxu0 %v137
    %299 = vmatpush1.msra.mxu0 %v136
    %300 = vmatprep.subr.mxu0 %v128
    %301 = vmatpush1.msra.mxu0 %v127
    %302 = vmatprep.subr.mxu0 %v119
    %303 = vmatpush1.msra.mxu0 %v118
    %304 = vmatprep.subr.mxu0 %v110
    %305 = vmatpush1.msra.mxu0 %v109
    %306 = vmatprep.subr.mxu0 %v101
    %307 = vmatpush1.msra.mxu0 %v100
    %308 = vmatprep.subr.mxu0 %v92
    %309 = vmatpush1.msra.mxu0 %v91
    %310 = vmatprep.subr.mxu0 %v83
    %311 = vmatpush1.msra.mxu0 %v82
    %312 = vmatprep.subr.mxu0 %v74
    %313 = vmatpush1.msra.mxu0 %v73
    %314 = vmatprep.subr.mxu0 %v65
    %315 = vmatpush1.msra.mxu0 %v64
    %316 = vmatprep.subr.mxu0 %v56
    %317 = vmatpush1.msra.mxu0 %v55
    %318 = vmatprep.subr.mxu0 %v47
    %319 = vmatpush1.msra.mxu0 %v46
    %320 = vmatprep.subr.mxu0 0.0
    %321 = vmatpush2.msra.mxu0 0.0
    %322 = vmatprep.subr.mxu0 0.0
    %323 = vmatpush2.msra.mxu0 0.0
    %324 = vmatprep.subr.mxu0 0.0
    %325 = vmatpush2.msra.mxu0 0.0
    %326 = vmatprep.subr.mxu0 0.0
    %327 = vmatpush2.msra.mxu0 0.0
    %328 = vmatprep.subr.mxu0 0.0
    %329 = vmatpush2.msra.mxu0 0.0
    %330 = vmatprep.subr.mxu0 0.0
    %331 = vmatpush2.msra.mxu0 0.0
    %332 = vmatprep.subr.mxu0 0.0
    %333 = vmatpush2.msra.mxu0 0.0
    %334 = vmatprep.subr.mxu0 0.0
    %335 = vmatpush2.msra.mxu0 0.0
    %336 = vmatprep.subr.mxu0 0.0
    %337 = vmatpush2.msra.mxu0 0.0
    %338 = vmatprep.subr.mxu0 %v265
    %339 = vmatpush2.msra.mxu0 %v262
    %340 = vmatprep.subr.mxu0 %v236
    %341 = vmatpush2.msra.mxu0 %v235
    %342 = vmatprep.subr.mxu0 %v227
    %343 = vmatpush2.msra.mxu0 %v226
    %344 = vmatprep.subr.mxu0 %v218
    %345 = vmatpush2.msra.mxu0 %v217
    %346 = vmatprep.subr.mxu0 %v209
    %347 = vmatpush2.msra.mxu0 %v208
    %348 = vmatprep.subr.mxu0 %v200
    %349 = vmatpush2.msra.mxu0 %v199
    %350 = vmatprep.subr.mxu0 %v191
    %351 = vmatpush2.msra.mxu0 %v190
    %352 = vmatprep.mubr.f32.mxu0 %v255
    %353 = vmatmul.mubr.f32.gmra.mxu0 %v42
    %v354 = vpop.f32.mrf.mxu0
    %v355 = vadd.f32 0.0, %v354
    %v356 = vpop.f32.mrf.mxu0
    %v357 = vadd.f32 0.0, %v356
    %358 = vmatprep.mubr.f32.mxu0 %v258
    %359 = vmatmul.mubr.f32.gmra.mxu0 %v44
    %v360 = vpop.f32.mrf.mxu0
    %v361 = vadd.f32 0.0, %v360
    %v362 = vpop.f32.mrf.mxu0
    %v363 = vadd.f32 0.0, %v362
    %364 = vdwg.mxu0
    %365 = vmatprep.subr.mxu0 %v184
    %366 = vmatpush1.msra.mxu0 %v183
    %367 = vmatprep.subr.mxu0 %v175
    %368 = vmatpush1.msra.mxu0 %v174
    %369 = vmatprep.subr.mxu0 %v166
    %370 = vmatpush1.msra.mxu0 %v165
    %371 = vmatprep.subr.mxu0 %v157
    %372 = vmatpush1.msra.mxu0 %v156
    %373 = vmatprep.subr.mxu0 %v148
    %374 = vmatpush1.msra.mxu0 %v147
    %375 = vmatprep.subr.mxu0 %v139
    %376 = vmatpush1.msra.mxu0 %v138
    %377 = vmatprep.subr.mxu0 %v130
    %378 = vmatpush1.msra.mxu0 %v129
    %379 = vmatprep.subr.mxu0 %v121
    %380 = vmatpush1.msra.mxu0 %v120
    %381 = vmatprep.subr.mxu0 %v112
    %382 = vmatpush1.msra.mxu0 %v111
    %383 = vmatprep.subr.mxu0 %v103
    %384 = vmatpush1.msra.mxu0 %v102
    %385 = vmatprep.subr.mxu0 %v94
    %386 = vmatpush1.msra.mxu0 %v93
    %387 = vmatprep.subr.mxu0 %v85
    %388 = vmatpush1.msra.mxu0 %v84
    %389 = vmatprep.subr.mxu0 %v76
    %390 = vmatpush1.msra.mxu0 %v75
    %391 = vmatprep.subr.mxu0 %v67
    %392 = vmatpush1.msra.mxu0 %v66
    %393 = vmatprep.subr.mxu0 %v58
    %394 = vmatpush1.msra.mxu0 %v57
    %395 = vmatprep.subr.mxu0 %v49
    %396 = vmatpush1.msra.mxu0 %v48
    %397 = vmatprep.subr.mxu0 0.0
    %398 = vmatpush2.msra.mxu0 0.0
    %399 = vmatprep.subr.mxu0 0.0
    %400 = vmatpush2.msra.mxu0 0.0
    %401 = vmatprep.subr.mxu0 0.0
    %402 = vmatpush2.msra.mxu0 0.0
    %403 = vmatprep.subr.mxu0 0.0
    %404 = vmatpush2.msra.mxu0 0.0
    %405 = vmatprep.subr.mxu0 0.0
    %406 = vmatpush2.msra.mxu0 0.0
    %407 = vmatprep.subr.mxu0 0.0
    %408 = vmatpush2.msra.mxu0 0.0
    %409 = vmatprep.subr.mxu0 0.0
    %410 = vmatpush2.msra.mxu0 0.0
    %411 = vmatprep.subr.mxu0 0.0
    %412 = vmatpush2.msra.mxu0 0.0
    %413 = vmatprep.subr.mxu0 0.0
    %414 = vmatpush2.msra.mxu0 0.0
    %415 = vmatprep.subr.mxu0 %v271
    %416 = vmatpush2.msra.mxu0 %v268
    %417 = vmatprep.subr.mxu0 %v238
    %418 = vmatpush2.msra.mxu0 %v237
    %419 = vmatprep.subr.mxu0 %v229
    %420 = vmatpush2.msra.mxu0 %v228
    %421 = vmatprep.subr.mxu0 %v220
    %422 = vmatpush2.msra.mxu0 %v219
    %423 = vmatprep.subr.mxu0 %v211
    %424 = vmatpush2.msra.mxu0 %v210
    %425 = vmatprep.subr.mxu0 %v202
    %426 = vmatpush2.msra.mxu0 %v201
    %427 = vmatprep.subr.mxu0 %v193
    %428 = vmatpush2.msra.mxu0 %v192
    %429 = vmatprep.mubr.f32.mxu0 %v255
    %430 = vmatmul.mubr.f32.gmra.mxu0 %v42
    %v431 = vpop.f32.mrf.mxu0
    %v432 = vadd.f32 0.0, %v431
    %v433 = vpop.f32.mrf.mxu0
    %v434 = vadd.f32 0.0, %v433
    %435 = vmatprep.mubr.f32.mxu0 %v258
    %436 = vmatmul.mubr.f32.gmra.mxu0 %v44
    %v437 = vpop.f32.mrf.mxu0
    %v438 = vadd.f32 0.0, %v437
    %v439 = vpop.f32.mrf.mxu0
    %v440 = vadd.f32 0.0, %v439
    %441 = vdwg.mxu0
    %442 = vmatprep.subr.mxu0 %v186
    %443 = vmatpush1.msra.mxu0 %v185
    %444 = vmatprep.subr.mxu0 %v177
    %445 = vmatpush1.msra.mxu0 %v176
    %446 = vmatprep.subr.mxu0 %v168
    %447 = vmatpush1.msra.mxu0 %v167
    %448 = vmatprep.subr.mxu0 %v159
    %449 = vmatpush1.msra.mxu0 %v158
    %450 = vmatprep.subr.mxu0 %v150
    %451 = vmatpush1.msra.mxu0 %v149
    %452 = vmatprep.subr.mxu0 %v141
    %453 = vmatpush1.msra.mxu0 %v140
    %454 = vmatprep.subr.mxu0 %v132
    %455 = vmatpush1.msra.mxu0 %v131
    %456 = vmatprep.subr.mxu0 %v123
    %457 = vmatpush1.msra.mxu0 %v122
    %458 = vmatprep.subr.mxu0 %v114
    %459 = vmatpush1.msra.mxu0 %v113
    %460 = vmatprep.subr.mxu0 %v105
    %461 = vmatpush1.msra.mxu0 %v104
    %462 = vmatprep.subr.mxu0 %v96
    %463 = vmatpush1.msra.mxu0 %v95
    %464 = vmatprep.subr.mxu0 %v87
    %465 = vmatpush1.msra.mxu0 %v86
    %466 = vmatprep.subr.mxu0 %v78
    %467 = vmatpush1.msra.mxu0 %v77
    %468 = vmatprep.subr.mxu0 %v69
    %469 = vmatpush1.msra.mxu0 %v68
    %470 = vmatprep.subr.mxu0 %v60
    %471 = vmatpush1.msra.mxu0 %v59
    %472 = vmatprep.subr.mxu0 %v51
    %473 = vmatpush1.msra.mxu0 %v50
    %474 = vmatprep.subr.mxu0 0.0
    %475 = vmatpush2.msra.mxu0 0.0
    %476 = vmatprep.subr.mxu0 0.0
    %477 = vmatpush2.msra.mxu0 0.0
    %478 = vmatprep.subr.mxu0 0.0
    %479 = vmatpush2.msra.mxu0 0.0
    %480 = vmatprep.subr.mxu0 0.0
    %481 = vmatpush2.msra.mxu0 0.0
    %482 = vmatprep.subr.mxu0 0.0
    %483 = vmatpush2.msra.mxu0 0.0
    %484 = vmatprep.subr.mxu0 0.0
    %485 = vmatpush2.msra.mxu0 0.0
    %486 = vmatprep.subr.mxu0 0.0
    %487 = vmatpush2.msra.mxu0 0.0
    %488 = vmatprep.subr.mxu0 0.0
    %489 = vmatpush2.msra.mxu0 0.0
    %490 = vmatprep.subr.mxu0 0.0
    %491 = vmatpush2.msra.mxu0 0.0
    %492 = vmatprep.subr.mxu0 %v277
    %493 = vmatpush2.msra.mxu0 %v274
    %494 = vmatprep.subr.mxu0 %v240
    %495 = vmatpush2.msra.mxu0 %v239
    %496 = vmatprep.subr.mxu0 %v231
    %497 = vmatpush2.msra.mxu0 %v230
    %498 = vmatprep.subr.mxu0 %v222
    %499 = vmatpush2.msra.mxu0 %v221
    %500 = vmatprep.subr.mxu0 %v213
    %501 = vmatpush2.msra.mxu0 %v212
    %502 = vmatprep.subr.mxu0 %v204
    %503 = vmatpush2.msra.mxu0 %v203
    %504 = vmatprep.subr.mxu0 %v195
    %505 = vmatpush2.msra.mxu0 %v194
    %506 = vmatprep.mubr.f32.mxu0 %v255
    %507 = vmatmul.mubr.f32.gmra.mxu0 %v42
    %v508 = vpop.f32.mrf.mxu0
    %v509 = vadd.f32 0.0, %v508
    %v510 = vpop.f32.mrf.mxu0
    %v511 = vadd.f32 0.0, %v510
    %512 = vmatprep.mubr.f32.mxu0 %v258
    %513 = vmatmul.mubr.f32.gmra.mxu0 %v44
    %v514 = vpop.f32.mrf.mxu0
    %v515 = vadd.f32 0.0, %v514
    %v516 = vpop.f32.mrf.mxu0
    %v517 = vadd.f32 0.0, %v516
    %518 = vdwg.mxu0
    %519 = vmatprep.subr.mxu0 %v188
    %520 = vmatpush1.msra.mxu0 %v187
    %521 = vmatprep.subr.mxu0 %v179
    %522 = vmatpush1.msra.mxu0 %v178
    %523 = vmatprep.subr.mxu0 %v170
    %524 = vmatpush1.msra.mxu0 %v169
    %525 = vmatprep.subr.mxu0 %v161
    %526 = vmatpush1.msra.mxu0 %v160
    %527 = vmatprep.subr.mxu0 %v152
    %528 = vmatpush1.msra.mxu0 %v151
    %529 = vmatprep.subr.mxu0 %v143
    %530 = vmatpush1.msra.mxu0 %v142
    %531 = vmatprep.subr.mxu0 %v134
    %532 = vmatpush1.msra.mxu0 %v133
    %533 = vmatprep.subr.mxu0 %v125
    %534 = vmatpush1.msra.mxu0 %v124
    %535 = vmatprep.subr.mxu0 %v116
    %536 = vmatpush1.msra.mxu0 %v115
    %537 = vmatprep.subr.mxu0 %v107
    %538 = vmatpush1.msra.mxu0 %v106
    %539 = vmatprep.subr.mxu0 %v98
    %540 = vmatpush1.msra.mxu0 %v97
    %541 = vmatprep.subr.mxu0 %v89
    %542 = vmatpush1.msra.mxu0 %v88
    %543 = vmatprep.subr.mxu0 %v80
    %544 = vmatpush1.msra.mxu0 %v79
    %545 = vmatprep.subr.mxu0 %v71
    %546 = vmatpush1.msra.mxu0 %v70
    %547 = vmatprep.subr.mxu0 %v62
    %548 = vmatpush1.msra.mxu0 %v61
    %549 = vmatprep.subr.mxu0 %v53
    %550 = vmatpush1.msra.mxu0 %v52
    %551 = vmatprep.subr.mxu0 0.0
    %552 = vmatpush2.msra.mxu0 0.0
    %553 = vmatprep.subr.mxu0 0.0
    %554 = vmatpush2.msra.mxu0 0.0
    %555 = vmatprep.subr.mxu0 0.0
    %556 = vmatpush2.msra.mxu0 0.0
    %557 = vmatprep.subr.mxu0 0.0
    %558 = vmatpush2.msra.mxu0 0.0
    %559 = vmatprep.subr.mxu0 0.0
    %560 = vmatpush2.msra.mxu0 0.0
    %561 = vmatprep.subr.mxu0 0.0
    %562 = vmatpush2.msra.mxu0 0.0
    %563 = vmatprep.subr.mxu0 0.0
    %564 = vmatpush2.msra.mxu0 0.0
    %565 = vmatprep.subr.mxu0 0.0
    %566 = vmatpush2.msra.mxu0 0.0
    %567 = vmatprep.subr.mxu0 0.0
    %568 = vmatpush2.msra.mxu0 0.0
    %569 = vmatprep.subr.mxu0 %v283
    %570 = vmatpush2.msra.mxu0 %v280
    %571 = vmatprep.subr.mxu0 %v242
    %572 = vmatpush2.msra.mxu0 %v241
    %573 = vmatprep.subr.mxu0 %v233
    %574 = vmatpush2.msra.mxu0 %v232
    %575 = vmatprep.subr.mxu0 %v224
    %576 = vmatpush2.msra.mxu0 %v223
    %577 = vmatprep.subr.mxu0 %v215
    %578 = vmatpush2.msra.mxu0 %v214
    %579 = vmatprep.subr.mxu0 %v206
    %580 = vmatpush2.msra.mxu0 %v205
    %581 = vmatprep.subr.mxu0 %v197
    %582 = vmatpush2.msra.mxu0 %v196
    %583 = vmatprep.mubr.f32.mxu0 %v255
    %584 = vmatmul.mubr.f32.gmra.mxu0 %v42
    %v585 = vpop.f32.mrf.mxu0
    %v586 = vadd.f32 0.0, %v585
    %v587 = vpop.f32.mrf.mxu0
    %v588 = vadd.f32 0.0, %v587
    %589 = vmatprep.mubr.f32.mxu0 %v258
    %590 = vmatmul.mubr.f32.gmra.mxu0 %v44
    %v591 = vpop.f32.mrf.mxu0
    %v592 = vadd.f32 0.0, %v591
    %v593 = vpop.f32.mrf.mxu0
    %v594 = vadd.f32 0.0, %v593
    %595 = vdwg.mxu0
    %596 = vmatprep.subr.mxu0 0.0
    %597 = vmatpush1.msra.mxu0 %v189
    %598 = vmatprep.subr.mxu0 0.0
    %599 = vmatpush1.msra.mxu0 %v180
    %600 = vmatprep.subr.mxu0 0.0
    %601 = vmatpush1.msra.mxu0 %v171
    %602 = vmatprep.subr.mxu0 0.0
    %603 = vmatpush1.msra.mxu0 %v162
    %604 = vmatprep.subr.mxu0 0.0
    %605 = vmatpush1.msra.mxu0 %v153
    %606 = vmatprep.subr.mxu0 0.0
    %607 = vmatpush1.msra.mxu0 %v144
    %608 = vmatprep.subr.mxu0 0.0
    %609 = vmatpush1.msra.mxu0 %v135
    %610 = vmatprep.subr.mxu0 0.0
    %611 = vmatpush1.msra.mxu0 %v126
    %612 = vmatprep.subr.mxu0 0.0
    %613 = vmatpush1.msra.mxu0 %v117
    %614 = vmatprep.subr.mxu0 0.0
    %615 = vmatpush1.msra.mxu0 %v108
    %616 = vmatprep.subr.mxu0 0.0
    %617 = vmatpush1.msra.mxu0 %v99
    %618 = vmatprep.subr.mxu0 0.0
    %619 = vmatpush1.msra.mxu0 %v90
    %620 = vmatprep.subr.mxu0 0.0
    %621 = vmatpush1.msra.mxu0 %v81
    %622 = vmatprep.subr.mxu0 0.0
    %623 = vmatpush1.msra.mxu0 %v72
    %624 = vmatprep.subr.mxu0 0.0
    %625 = vmatpush1.msra.mxu0 %v63
    %626 = vmatprep.subr.mxu0 0.0
    %627 = vmatpush1.msra.mxu0 %v54
    %628 = vmatprep.subr.mxu0 0.0
    %629 = vmatpush2.msra.mxu0 0.0
    %630 = vmatprep.subr.mxu0 0.0
    %631 = vmatpush2.msra.mxu0 0.0
    %632 = vmatprep.subr.mxu0 0.0
    %633 = vmatpush2.msra.mxu0 0.0
    %634 = vmatprep.subr.mxu0 0.0
    %635 = vmatpush2.msra.mxu0 0.0
    %636 = vmatprep.subr.mxu0 0.0
    %637 = vmatpush2.msra.mxu0 0.0
    %638 = vmatprep.subr.mxu0 0.0
    %639 = vmatpush2.msra.mxu0 0.0
    %640 = vmatprep.subr.mxu0 0.0
    %641 = vmatpush2.msra.mxu0 0.0
    %642 = vmatprep.subr.mxu0 0.0
    %643 = vmatpush2.msra.mxu0 0.0
    %644 = vmatprep.subr.mxu0 0.0
    %645 = vmatpush2.msra.mxu0 0.0
    %646 = vmatprep.subr.mxu0 0.0
    %647 = vmatpush2.msra.mxu0 %v286
    %648 = vmatprep.subr.mxu0 0.0
    %649 = vmatpush2.msra.mxu0 %v243
    %650 = vmatprep.subr.mxu0 0.0
    %651 = vmatpush2.msra.mxu0 %v234
    %652 = vmatprep.subr.mxu0 0.0
    %653 = vmatpush2.msra.mxu0 %v225
    %654 = vmatprep.subr.mxu0 0.0
    %655 = vmatpush2.msra.mxu0 %v216
    %656 = vmatprep.subr.mxu0 0.0
    %657 = vmatpush2.msra.mxu0 %v207
    %658 = vmatprep.subr.mxu0 0.0
    %659 = vmatpush2.msra.mxu0 %v198
    %660 = vmatprep.mubr.f32.mxu0 %v255
    %661 = vmatmul.mubr.f32.gmra.mxu0 %v42
    %v662 = vpop.f32.mrf.mxu0
    %v663 = vadd.f32 0.0, %v662
    %v664 = vpop.f32.mrf.mxu0
    %665 = vmatprep.mubr.f32.mxu0 %v258
    %666 = vmatmul.mubr.f32.gmra.mxu0 %v44
    %v667 = vpop.f32.mrf.mxu0
    %v668 = vadd.f32 0.0, %v667
    %v669 = vpop.f32.mrf.mxu0
    %670 = vdwg.mxu0
    %v671 = vmax.f32 %v355, 0.0
    %v672 = vmax.f32 %v357, 0.0
    %v673 = vmax.f32 %v432, 0.0
    %v674 = vmax.f32 %v361, 0.0
    %v675 = vmax.f32 %v363, 0.0
    %v676 = vmax.f32 %v438, 0.0
    %v677 = vld [vmem:[#allocation4] sm:$0xff]
    %v678 = vld [vmem:[#allocation4 + $0x8] sm:$0xff]
    %v679 = vld [vmem:[#allocation4 + $0x10] sm:$0xff]
    %v680 = vld [vmem:[#allocation4 + $0x18] sm:$0xff]
    %v681 = vld [vmem:[#allocation4 + $0x20] sm:$0xff]
    %v682 = vld [vmem:[#allocation4 + $0x28] sm:$0xff]
    %v683 = vld [vmem:[#allocation4 + $0x30] sm:$0xff]
    %v684 = vld [vmem:[#allocation4 + $0x38] sm:$0xff]
    %v685 = vld [vmem:[#allocation4 + $0x40] sm:$0xff]
    %v686 = vld [vmem:[#allocation4 + $0x48] sm:$0xff]
    %v687 = vld [vmem:[#allocation4 + $0x50] sm:$0xff]
    %v688 = vld [vmem:[#allocation4 + $0x58] sm:$0xff]
    %v689 = vld [vmem:[#allocation4 + $0x60] sm:$0xff]
    %v690 = vld [vmem:[#allocation4 + $0x68] sm:$0xff]
    %v691 = vld [vmem:[#allocation4 + $0x70] sm:$0xff]
    %v692 = vld [vmem:[#allocation4 + $0x78] sm:$0xff]
    %v693 = vld [vmem:[#allocation4 + $0x80] sm:$0xff]
    %v694 = vld [vmem:[#allocation4 + $0x88] sm:$0xff]
    %v695 = vld [vmem:[#allocation4 + $0x90] sm:$0xff]
    %v696 = vld [vmem:[#allocation4 + $0x98] sm:$0xff]
    %v697 = vld [vmem:[#allocation4 + $0xa0] sm:$0xff]
    %v698 = vld [vmem:[#allocation4 + $0xa8] sm:$0xff]
    %v699 = vld [vmem:[#allocation4 + $0xb0] sm:$0xff]
    %v700 = vld [vmem:[#allocation4 + $0xb8] sm:$0xff]
    %v701 = vld [vmem:[#allocation4 + $0xc0] sm:$0xff]
    %v702 = vld [vmem:[#allocation4 + $0xc8] sm:$0xff]
    %v703 = vld [vmem:[#allocation4 + $0xd0] sm:$0xff]
    %v704 = vld [vmem:[#allocation4 + $0xd8] sm:$0xff]
    %v705 = vld [vmem:[#allocation4 + $0xe0] sm:$0xff]
    %v706 = vld [vmem:[#allocation4 + $0xe8] sm:$0xff]
    %v707 = vld [vmem:[#allocation4 + $0xf0] sm:$0xff]
    %v708 = vld [vmem:[#allocation4 + $0xf8] sm:$0xff]
    %v709 = vld [vmem:[#allocation4 + $0x100] sm:$0xff]
    %v710 = vld [vmem:[#allocation4 + $0x108] sm:$0xff]
    %v711 = vld [vmem:[#allocation4 + $0x110] sm:$0xff]
    %v712 = vld [vmem:[#allocation4 + $0x118] sm:$0xff]
    %v713 = vld [vmem:[#allocation4 + $0x120] sm:$0xff]
    %v714 = vld [vmem:[#allocation4 + $0x128] sm:$0xff]
    %v715 = vld [vmem:[#allocation4 + $0x130] sm:$0xff]
    %v716 = vld [vmem:[#allocation4 + $0x138] sm:$0xff]
    %v717 = vld [vmem:[#allocation4 + $0x140] sm:$0xff]
    %v718 = vld [vmem:[#allocation4 + $0x148] sm:$0xff]
    %v719 = vld [vmem:[#allocation4 + $0x150] sm:$0xff]
    %v720 = vld [vmem:[#allocation4 + $0x158] sm:$0xff]
    %v721 = vld [vmem:[#allocation4 + $0x160] sm:$0xff]
    %v722 = vld [vmem:[#allocation4 + $0x168] sm:$0xff]
    %v723 = vld [vmem:[#allocation4 + $0x170] sm:$0xff]
    %v724 = vld [vmem:[#allocation4 + $0x178] sm:$0xff]
    %v725 = vld [vmem:[#allocation4 + $0x180] sm:$0xff]
    %v726 = vld [vmem:[#allocation4 + $0x188] sm:$0xff]
    %v727 = vld [vmem:[#allocation4 + $0x190] sm:$0xff]
    %v728 = vld [vmem:[#allocation4 + $0x198] sm:$0xff]
    %v729 = vld [vmem:[#allocation4 + $0x1a0] sm:$0xff]
    %v730 = vld [vmem:[#allocation4 + $0x1a8] sm:$0xff]
    %v731 = vld [vmem:[#allocation4 + $0x1b0] sm:$0xff]
    %v732 = vld [vmem:[#allocation4 + $0x1b8] sm:$0xff]
    %v733 = vld [vmem:[#allocation4 + $0x1c0] sm:$0xff]
    %v734 = vld [vmem:[#allocation4 + $0x1c8] sm:$0xff]
    %v735 = vld [vmem:[#allocation4 + $0x1d0] sm:$0xff]
    %v736 = vld [vmem:[#allocation4 + $0x1d8] sm:$0xff]
    %v737 = vld [vmem:[#allocation4 + $0x1e0] sm:$0xff]
    %v738 = vld [vmem:[#allocation4 + $0x1e8] sm:$0xff]
    %v739 = vld [vmem:[#allocation4 + $0x1f0] sm:$0xff]
    %v740 = vld [vmem:[#allocation4 + $0x1f8] sm:$0xff]
    %v741 = vld [vmem:[#allocation4 + $0x200] sm:$0xff]
    %v742 = vld [vmem:[#allocation4 + $0x208] sm:$0xff]
    %v743 = vld [vmem:[#allocation4 + $0x210] sm:$0xff]
    %v744 = vld [vmem:[#allocation4 + $0x218] sm:$0xff]
    %v745 = vld [vmem:[#allocation4 + $0x220] sm:$0xff]
    %v746 = vld [vmem:[#allocation4 + $0x228] sm:$0xff]
    %v747 = vld [vmem:[#allocation4 + $0x230] sm:$0xff]
    %v748 = vld [vmem:[#allocation4 + $0x238] sm:$0xff]
    %v749 = vld [vmem:[#allocation4 + $0x240] sm:$0xff]
    %v750 = vld [vmem:[#allocation4 + $0x248] sm:$0xff]
    %v751 = vld [vmem:[#allocation4 + $0x250] sm:$0xff]
    %v752 = vld [vmem:[#allocation4 + $0x258] sm:$0xff]
    %v753 = vld [vmem:[#allocation4 + $0x260] sm:$0xff]
    %v754 = vld [vmem:[#allocation4 + $0x268] sm:$0xff]
    %v755 = vld [vmem:[#allocation4 + $0x270] sm:$0xff]
    %v756 = vld [vmem:[#allocation4 + $0x278] sm:$0xff]
    %v757 = vld [vmem:[#allocation4 + $0x280] sm:$0xff]
    %v758 = vld [vmem:[#allocation4 + $0x288] sm:$0xff]
    %v759 = vld [vmem:[#allocation4 + $0x290] sm:$0xff]
    %v760 = vld [vmem:[#allocation4 + $0x298] sm:$0xff]
    %v761 = vld [vmem:[#allocation4 + $0x2a0] sm:$0xff]
    %v762 = vld [vmem:[#allocation4 + $0x2a8] sm:$0xff]
    %v763 = vld [vmem:[#allocation4 + $0x2b0] sm:$0xff]
    %v764 = vld [vmem:[#allocation4 + $0x2b8] sm:$0xff]
    %v765 = vld [vmem:[#allocation4 + $0x2c0] sm:$0xff]
    %v766 = vld [vmem:[#allocation4 + $0x2c8] sm:$0xff]
    %v767 = vld [vmem:[#allocation4 + $0x2d0] sm:$0xff]
    %v768 = vld [vmem:[#allocation4 + $0x2d8] sm:$0xff]
    %v769 = vld [vmem:[#allocation4 + $0x2e0] sm:$0xff]
    %v770 = vld [vmem:[#allocation4 + $0x2e8] sm:$0xff]
    %v771 = vld [vmem:[#allocation4 + $0x2f0] sm:$0xff]
    %v772 = vld [vmem:[#allocation4 + $0x2f8] sm:$0xff]
    %v773 = vld [vmem:[#allocation4 + $0x300] sm:$0xff]
    %v774 = vld [vmem:[#allocation4 + $0x308] sm:$0xff]
    %v775 = vld [vmem:[#allocation4 + $0x310] sm:$0xff]
    %v776 = vld [vmem:[#allocation4 + $0x318] sm:$0xff]
    %v777 = vld [vmem:[#allocation4 + $0x320] sm:$0xff]
    %v778 = vld [vmem:[#allocation4 + $0x328] sm:$0xff]
    %v779 = vld [vmem:[#allocation4 + $0x330] sm:$0xff]
    %v780 = vld [vmem:[#allocation4 + $0x338] sm:$0xff]
    %v781 = vld [vmem:[#allocation4 + $0x340] sm:$0xff]
    %v782 = vld [vmem:[#allocation4 + $0x348] sm:$0xff]
    %v783 = vld [vmem:[#allocation4 + $0x350] sm:$0xff]
    %v784 = vld [vmem:[#allocation4 + $0x358] sm:$0xff]
    %v785 = vld [vmem:[#allocation4 + $0x360] sm:$0xff]
    %v786 = vld [vmem:[#allocation4 + $0x368] sm:$0xff]
    %v787 = vld [vmem:[#allocation4 + $0x370] sm:$0xff]
    %v788 = vld [vmem:[#allocation4 + $0x378] sm:$0xff]
    %v789 = vld [vmem:[#allocation4 + $0x380] sm:$0xff]
    %v790 = vld [vmem:[#allocation4 + $0x388] sm:$0xff]
    %v791 = vld [vmem:[#allocation4 + $0x390] sm:$0xff]
    %v792 = vld [vmem:[#allocation4 + $0x398] sm:$0xff]
    %v793 = vld [vmem:[#allocation4 + $0x3a0] sm:$0xff]
    %v794 = vld [vmem:[#allocation4 + $0x3a8] sm:$0xff]
    %v795 = vld [vmem:[#allocation4 + $0x3b0] sm:$0xff]
    %v796 = vld [vmem:[#allocation4 + $0x3b8] sm:$0xff]
    %v797 = vld [vmem:[#allocation4 + $0x3c0] sm:$0xff]
    %v798 = vld [vmem:[#allocation4 + $0x3c8] sm:$0xff]
    %v799 = vld [vmem:[#allocation4 + $0x3d0] sm:$0xff]
    %v800 = vld [vmem:[#allocation4 + $0x3d8] sm:$0xff]
    %v801 = vld [vmem:[#allocation4 + $0x3e0] sm:$0xff]
    %v802 = vld [vmem:[#allocation4 + $0x3e8] sm:$0xff]
    %v803 = vld [vmem:[#allocation4 + $0x3f0] sm:$0xff]
    %v804 = vld [vmem:[#allocation4 + $0x3f8] sm:$0xff]
    %v805 = vld [vmem:[#allocation4 + $0x400] sm:$0xff]
    %v806 = vld [vmem:[#allocation4 + $0x408] sm:$0xff]
    %v807 = vld [vmem:[#allocation4 + $0x410] sm:$0xff]
    %v808 = vld [vmem:[#allocation4 + $0x418] sm:$0xff]
    %v809 = vld [vmem:[#allocation4 + $0x420] sm:$0xff]
    %v810 = vld [vmem:[#allocation4 + $0x428] sm:$0xff]
    %v811 = vld [vmem:[#allocation4 + $0x430] sm:$0xff]
    %v812 = vld [vmem:[#allocation4 + $0x438] sm:$0xff]
    %v813 = vld [vmem:[#allocation4 + $0x440] sm:$0xff]
    %v814 = vld [vmem:[#allocation4 + $0x448] sm:$0xff]
    %v815 = vld [vmem:[#allocation4 + $0x450] sm:$0xff]
    %v816 = vld [vmem:[#allocation4 + $0x458] sm:$0xff]
    %v817 = vld [vmem:[#allocation4 + $0x460] sm:$0xff]
    %v818 = vld [vmem:[#allocation4 + $0x468] sm:$0xff]
    %v819 = vld [vmem:[#allocation4 + $0x470] sm:$0xff]
    %v820 = vld [vmem:[#allocation4 + $0x478] sm:$0xff]
    %v821 = vld [vmem:[#allocation4 + $0x480] sm:$0xff]
    %v822 = vld [vmem:[#allocation4 + $0x488] sm:$0xff]
    %v823 = vld [vmem:[#allocation4 + $0x490] sm:$0xff]
    %v824 = vld [vmem:[#allocation4 + $0x498] sm:$0xff]
    %v825 = vld [vmem:[#allocation4 + $0x4a0] sm:$0xff]
    %v826 = vld [vmem:[#allocation4 + $0x4a8] sm:$0xff]
    %v827 = vld [vmem:[#allocation4 + $0x4b0] sm:$0xff]
    %v828 = vld [vmem:[#allocation4 + $0x4b8] sm:$0xff]
    %v829 = vld [vmem:[#allocation4 + $0x4c0] sm:$0xff]
    %v830 = vld [vmem:[#allocation4 + $0x4c8] sm:$0xff]
    %v831 = vld [vmem:[#allocation4 + $0x4d0] sm:$0xff]
    %v832 = vld [vmem:[#allocation4 + $0x4d8] sm:$0xff]
    %v833 = vld [vmem:[#allocation4 + $0x4e0] sm:$0xff]
    %v834 = vld [vmem:[#allocation4 + $0x4e8] sm:$0xff]
    %v835 = vld [vmem:[#allocation4 + $0x4f0] sm:$0xff]
    %v836 = vld [vmem:[#allocation4 + $0x4f8] sm:$0xff]
    %v837 = vld [vmem:[#allocation4 + $0x500] sm:$0xff]
    %v838 = vld [vmem:[#allocation4 + $0x508] sm:$0xff]
    %v839 = vld [vmem:[#allocation4 + $0x510] sm:$0xff]
    %v840 = vld [vmem:[#allocation4 + $0x518] sm:$0xff]
    %v841 = vld [vmem:[#allocation4 + $0x520] sm:$0xff]
    %v842 = vld [vmem:[#allocation4 + $0x528] sm:$0xff]
    %v843 = vld [vmem:[#allocation4 + $0x530] sm:$0xff]
    %v844 = vld [vmem:[#allocation4 + $0x538] sm:$0xff]
    %v845 = vld [vmem:[#allocation4 + $0x540] sm:$0xff]
    %v846 = vld [vmem:[#allocation4 + $0x548] sm:$0xff]
    %v847 = vld [vmem:[#allocation4 + $0x550] sm:$0xff]
    %v848 = vld [vmem:[#allocation4 + $0x558] sm:$0xff]
    %v849 = vld [vmem:[#allocation4 + $0x560] sm:$0xff]
    %v850 = vld [vmem:[#allocation4 + $0x568] sm:$0xff]
    %v851 = vld [vmem:[#allocation4 + $0x570] sm:$0xff]
    %v852 = vld [vmem:[#allocation4 + $0x578] sm:$0xff]
    %v853 = vld [vmem:[#allocation4 + $0x580] sm:$0xff]
    %v854 = vld [vmem:[#allocation4 + $0x588] sm:$0xff]
    %v855 = vld [vmem:[#allocation4 + $0x590] sm:$0xff]
    %v856 = vld [vmem:[#allocation4 + $0x598] sm:$0xff]
    %v857 = vld [vmem:[#allocation4 + $0x5a0] sm:$0xff]
    %v858 = vld [vmem:[#allocation4 + $0x5a8] sm:$0xff]
    %v859 = vld [vmem:[#allocation4 + $0x5b0] sm:$0xff]
    %v860 = vld [vmem:[#allocation4 + $0x5b8] sm:$0xff]
    %v861 = vld [vmem:[#allocation4 + $0x5c0] sm:$0xff]
    %v862 = vld [vmem:[#allocation4 + $0x5c8] sm:$0xff]
    %v863 = vld [vmem:[#allocation4 + $0x5d0] sm:$0xff]
    %v864 = vld [vmem:[#allocation4 + $0x5d8] sm:$0xff]
    %v865 = vld [vmem:[#allocation4 + $0x5e0] sm:$0xff]
    %v866 = vld [vmem:[#allocation4 + $0x5e8] sm:$0xff]
    %v867 = vld [vmem:[#allocation4 + $0x5f0] sm:$0xff]
    %v868 = vld [vmem:[#allocation4 + $0x5f8] sm:$0xff]
    %v869 = vld [vmem:[#allocation4 + $0x600] sm:$0xff]
    %v870 = vld [vmem:[#allocation4 + $0x608] sm:$0xff]
    %v871 = vld [vmem:[#allocation4 + $0x610] sm:$0xff]
    %v872 = vld [vmem:[#allocation4 + $0x618] sm:$0xff]
    %v873 = vld [vmem:[#allocation4 + $0x620] sm:$0xff]
    %v874 = vld [vmem:[#allocation4 + $0x628] sm:$0xff]
    %v875 = vld [vmem:[#allocation4 + $0x630] sm:$0xff]
    %v876 = vld [vmem:[#allocation4 + $0x638] sm:$0xff]
    %v877 = vld [vmem:[#allocation4 + $0x640] sm:$0xff]
    %v878 = vld [vmem:[#allocation4 + $0x648] sm:$0xff]
    %v879 = vld [vmem:[#allocation4 + $0x650] sm:$0xff]
    %v880 = vld [vmem:[#allocation4 + $0x658] sm:$0xff]
    %v881 = vld [vmem:[#allocation4 + $0x660] sm:$0xff]
    %v882 = vld [vmem:[#allocation4 + $0x668] sm:$0xff]
    %v883 = vld [vmem:[#allocation4 + $0x670] sm:$0xff]
    %v884 = vld [vmem:[#allocation4 + $0x678] sm:$0xff]
    %v885 = vld [vmem:[#allocation4 + $0x680] sm:$0xff]
    %v886 = vld [vmem:[#allocation4 + $0x688] sm:$0xff]
    %v887 = vld [vmem:[#allocation4 + $0x690] sm:$0xff]
    %v888 = vld [vmem:[#allocation4 + $0x698] sm:$0xff]
    %v889 = vld [vmem:[#allocation4 + $0x6a0] sm:$0xff]
    %v890 = vld [vmem:[#allocation4 + $0x6a8] sm:$0xff]
    %v891 = vld [vmem:[#allocation4 + $0x6b0] sm:$0xff]
    %v892 = vld [vmem:[#allocation4 + $0x6b8] sm:$0xff]
    %v893 = vld [vmem:[#allocation4 + $0x6c0] sm:$0xff]
    %v894 = vld [vmem:[#allocation4 + $0x6c8] sm:$0xff]
    %v895 = vld [vmem:[#allocation4 + $0x6d0] sm:$0xff]
    %v896 = vld [vmem:[#allocation4 + $0x6d8] sm:$0xff]
    %v897 = vld [vmem:[#allocation4 + $0x6e0] sm:$0xff]
    %v898 = vld [vmem:[#allocation4 + $0x6e8] sm:$0xff]
    %v899 = vld [vmem:[#allocation4 + $0x6f0] sm:$0xff]
    %v900 = vld [vmem:[#allocation4 + $0x6f8] sm:$0xff]
    %v901 = vld [vmem:[#allocation4 + $0x700] sm:$0xff]
    %v902 = vld [vmem:[#allocation4 + $0x708] sm:$0xff]
    %v903 = vld [vmem:[#allocation4 + $0x710] sm:$0xff]
    %v904 = vld [vmem:[#allocation4 + $0x718] sm:$0xff]
    %v905 = vld [vmem:[#allocation4 + $0x720] sm:$0xff]
    %v906 = vld [vmem:[#allocation4 + $0x728] sm:$0xff]
    %v907 = vld [vmem:[#allocation4 + $0x730] sm:$0xff]
    %v908 = vld [vmem:[#allocation4 + $0x738] sm:$0xff]
    %v909 = vld [vmem:[#allocation4 + $0x740] sm:$0xff]
    %v910 = vld [vmem:[#allocation4 + $0x748] sm:$0xff]
    %v911 = vld [vmem:[#allocation4 + $0x750] sm:$0xff]
    %v912 = vld [vmem:[#allocation4 + $0x758] sm:$0xff]
    %v913 = vld [vmem:[#allocation4 + $0x760] sm:$0xff]
    %v914 = vld [vmem:[#allocation4 + $0x768] sm:$0xff]
    %v915 = vld [vmem:[#allocation4 + $0x770] sm:$0xff]
    %v916 = vld [vmem:[#allocation4 + $0x778] sm:$0xff]
    %v917 = vld [vmem:[#allocation4 + $0x780] sm:$0xff]
    %v918 = vld [vmem:[#allocation4 + $0x788] sm:$0xff]
    %v919 = vld [vmem:[#allocation4 + $0x790] sm:$0xff]
    %v920 = vld [vmem:[#allocation4 + $0x798] sm:$0xff]
    %v921 = vld [vmem:[#allocation4 + $0x7a0] sm:$0xff]
    %v922 = vld [vmem:[#allocation4 + $0x7a8] sm:$0xff]
    %v923 = vld [vmem:[#allocation4 + $0x7b0] sm:$0xff]
    %v924 = vld [vmem:[#allocation4 + $0x7b8] sm:$0xff]
    %v925 = vld [vmem:[#allocation4 + $0x7c0] sm:$0xff]
    %v926 = vld [vmem:[#allocation4 + $0x7c8] sm:$0xff]
    %v927 = vld [vmem:[#allocation4 + $0x7d0] sm:$0xff]
    %v928 = vld [vmem:[#allocation4 + $0x7d8] sm:$0xff]
    %v929 = vld [vmem:[#allocation4 + $0x7e0] sm:$0xff]
    %v930 = vld [vmem:[#allocation4 + $0x7e8] sm:$0xff]
    %v931 = vld [vmem:[#allocation4 + $0x7f0] sm:$0xff]
    %v932 = vld [vmem:[#allocation4 + $0x7f8] sm:$0xff]
    %v933 = vld [vmem:[#allocation4 + $0x800] sm:$0xff]
    %v934 = vld [vmem:[#allocation4 + $0x808] sm:$0xff]
    %v935 = vld [vmem:[#allocation4 + $0x810] sm:$0xff]
    %v936 = vld [vmem:[#allocation4 + $0x818] sm:$0xff]
    %v937 = vld [vmem:[#allocation4 + $0x820] sm:$0xff]
    %v938 = vld [vmem:[#allocation4 + $0x828] sm:$0xff]
    %v939 = vld [vmem:[#allocation4 + $0x830] sm:$0xff]
    %v940 = vld [vmem:[#allocation4 + $0x838] sm:$0xff]
    %v941 = vld [vmem:[#allocation4 + $0x840] sm:$0xff]
    %v942 = vld [vmem:[#allocation4 + $0x848] sm:$0xff]
    %v943 = vld [vmem:[#allocation4 + $0x850] sm:$0xff]
    %v944 = vld [vmem:[#allocation4 + $0x858] sm:$0xff]
    %v945 = vld [vmem:[#allocation4 + $0x860] sm:$0xff]
    %v946 = vld [vmem:[#allocation4 + $0x868] sm:$0xff]
    %v947 = vld [vmem:[#allocation4 + $0x870] sm:$0xff]
    %v948 = vld [vmem:[#allocation4 + $0x878] sm:$0xff]
    %v949 = vld [vmem:[#allocation4 + $0x880] sm:$0xff]
    %v950 = vld [vmem:[#allocation4 + $0x888] sm:$0xff]
    %v951 = vld [vmem:[#allocation4 + $0x890] sm:$0xff]
    %v952 = vld [vmem:[#allocation4 + $0x898] sm:$0xff]
    %v953 = vld [vmem:[#allocation4 + $0x8a0] sm:$0xff]
    %v954 = vld [vmem:[#allocation4 + $0x8a8] sm:$0xff]
    %v955 = vld [vmem:[#allocation4 + $0x8b0] sm:$0xff]
    %v956 = vld [vmem:[#allocation4 + $0x8b8] sm:$0xff]
    %v957 = vld [vmem:[#allocation4 + $0x8c0] sm:$0xff]
    %v958 = vld [vmem:[#allocation4 + $0x8c8] sm:$0xff]
    %v959 = vld [vmem:[#allocation4 + $0x8d0] sm:$0xff]
    %v960 = vld [vmem:[#allocation4 + $0x8d8] sm:$0xff]
    %v961 = vld [vmem:[#allocation4 + $0x8e0] sm:$0xff]
    %v962 = vld [vmem:[#allocation4 + $0x8e8] sm:$0xff]
    %v963 = vld [vmem:[#allocation4 + $0x8f0] sm:$0xff]
    %v964 = vld [vmem:[#allocation4 + $0x8f8] sm:$0xff]
    %965 = vmatprep.subr.mxu0 %v768
    %966 = vmatpush1.msra.mxu0 %v767
    %967 = vmatprep.subr.mxu0 %v762
    %968 = vmatpush1.msra.mxu0 %v761
    %969 = vmatprep.subr.mxu0 %v756
    %970 = vmatpush1.msra.mxu0 %v755
    %971 = vmatprep.subr.mxu0 %v750
    %972 = vmatpush1.msra.mxu0 %v749
    %973 = vmatprep.subr.mxu0 %v744
    %974 = vmatpush1.msra.mxu0 %v743
    %975 = vmatprep.subr.mxu0 %v738
    %976 = vmatpush1.msra.mxu0 %v737
    %977 = vmatprep.subr.mxu0 %v732
    %978 = vmatpush1.msra.mxu0 %v731
    %979 = vmatprep.subr.mxu0 %v726
    %980 = vmatpush1.msra.mxu0 %v725
    %981 = vmatprep.subr.mxu0 %v720
    %982 = vmatpush1.msra.mxu0 %v719
    %983 = vmatprep.subr.mxu0 %v714
    %984 = vmatpush1.msra.mxu0 %v713
    %985 = vmatprep.subr.mxu0 %v708
    %986 = vmatpush1.msra.mxu0 %v707
    %987 = vmatprep.subr.mxu0 %v702
    %988 = vmatpush1.msra.mxu0 %v701
    %989 = vmatprep.subr.mxu0 %v696
    %990 = vmatpush1.msra.mxu0 %v695
    %991 = vmatprep.subr.mxu0 %v690
    %992 = vmatpush1.msra.mxu0 %v689
    %993 = vmatprep.subr.mxu0 %v684
    %994 = vmatpush1.msra.mxu0 %v683
    %995 = vmatprep.subr.mxu0 %v678
    %996 = vmatpush1.msra.mxu0 %v677
    %997 = vmatprep.subr.mxu0 %v864
    %998 = vmatpush2.msra.mxu0 %v863
    %999 = vmatprep.subr.mxu0 %v858
    %1000 = vmatpush2.msra.mxu0 %v857
    %1001 = vmatprep.subr.mxu0 %v852
    %1002 = vmatpush2.msra.mxu0 %v851
    %1003 = vmatprep.subr.mxu0 %v846
    %1004 = vmatpush2.msra.mxu0 %v845
    %1005 = vmatprep.subr.mxu0 %v840
    %1006 = vmatpush2.msra.mxu0 %v839
    %1007 = vmatprep.subr.mxu0 %v834
    %1008 = vmatpush2.msra.mxu0 %v833
    %1009 = vmatprep.subr.mxu0 %v828
    %1010 = vmatpush2.msra.mxu0 %v827
    %1011 = vmatprep.subr.mxu0 %v822
    %1012 = vmatpush2.msra.mxu0 %v821
    %1013 = vmatprep.subr.mxu0 %v816
    %1014 = vmatpush2.msra.mxu0 %v815
    %1015 = vmatprep.subr.mxu0 %v810
    %1016 = vmatpush2.msra.mxu0 %v809
    %1017 = vmatprep.subr.mxu0 %v804
    %1018 = vmatpush2.msra.mxu0 %v803
    %1019 = vmatprep.subr.mxu0 %v798
    %1020 = vmatpush2.msra.mxu0 %v797
    %1021 = vmatprep.subr.mxu0 %v792
    %1022 = vmatpush2.msra.mxu0 %v791
    %1023 = vmatprep.subr.mxu0 %v786
    %1024 = vmatpush2.msra.mxu0 %v785
    %1025 = vmatprep.subr.mxu0 %v780
    %1026 = vmatpush2.msra.mxu0 %v779
    %1027 = vmatprep.subr.mxu0 %v774
    %1028 = vmatpush2.msra.mxu0 %v773
    %1029 = vmatprep.mubr.f32.mxu0 %v672
    %1030 = vmatmul.mubr.f32.gmra.mxu0 %v671
    %v1031 = vpop.f32.mrf.mxu0
    %v1032 = vadd.f32 %v434, %v1031
    %v1033 = vpop.f32.mrf.mxu0
    %v1034 = vadd.f32 %v509, %v1033
    %1035 = vmatprep.mubr.f32.mxu0 %v675
    %1036 = vmatmul.mubr.f32.gmra.mxu0 %v674
    %v1037 = vpop.f32.mrf.mxu0
    %v1038 = vadd.f32 %v440, %v1037
    %v1039 = vpop.f32.mrf.mxu0
    %v1040 = vadd.f32 %v515, %v1039
    %1041 = vdwg.mxu0
    %1042 = vmatprep.subr.mxu0 %v960
    %1043 = vmatpush1.msra.mxu0 %v959
    %1044 = vmatprep.subr.mxu0 %v954
    %1045 = vmatpush1.msra.mxu0 %v953
    %1046 = vmatprep.subr.mxu0 %v948
    %1047 = vmatpush1.msra.mxu0 %v947
    %1048 = vmatprep.subr.mxu0 %v942
    %1049 = vmatpush1.msra.mxu0 %v941
    %1050 = vmatprep.subr.mxu0 %v936
    %1051 = vmatpush1.msra.mxu0 %v935
    %1052 = vmatprep.subr.mxu0 %v930
    %1053 = vmatpush1.msra.mxu0 %v929
    %1054 = vmatprep.subr.mxu0 %v924
    %1055 = vmatpush1.msra.mxu0 %v923
    %1056 = vmatprep.subr.mxu0 %v918
    %1057 = vmatpush1.msra.mxu0 %v917
    %1058 = vmatprep.subr.mxu0 %v912
    %1059 = vmatpush1.msra.mxu0 %v911
    %1060 = vmatprep.subr.mxu0 %v906
    %1061 = vmatpush1.msra.mxu0 %v905
    %1062 = vmatprep.subr.mxu0 %v900
    %1063 = vmatpush1.msra.mxu0 %v899
    %1064 = vmatprep.subr.mxu0 %v894
    %1065 = vmatpush1.msra.mxu0 %v893
    %1066 = vmatprep.subr.mxu0 %v888
    %1067 = vmatpush1.msra.mxu0 %v887
    %1068 = vmatprep.subr.mxu0 %v882
    %1069 = vmatpush1.msra.mxu0 %v881
    %1070 = vmatprep.subr.mxu0 %v876
    %1071 = vmatpush1.msra.mxu0 %v875
    %1072 = vmatprep.subr.mxu0 %v870
    %1073 = vmatpush1.msra.mxu0 %v869
    %1074 = vmatprep.subr.mxu0 0.0
    %1075 = vmatpush2.msra.mxu0 0.0
    %1076 = vmatprep.subr.mxu0 0.0
    %1077 = vmatpush2.msra.mxu0 0.0
    %1078 = vmatprep.subr.mxu0 0.0
    %1079 = vmatpush2.msra.mxu0 0.0
    %1080 = vmatprep.subr.mxu0 0.0
    %1081 = vmatpush2.msra.mxu0 0.0
    %1082 = vmatprep.subr.mxu0 0.0
    %1083 = vmatpush2.msra.mxu0 0.0
    %1084 = vmatprep.subr.mxu0 0.0
    %1085 = vmatpush2.msra.mxu0 0.0
    %1086 = vmatprep.subr.mxu0 0.0
    %1087 = vmatpush2.msra.mxu0 0.0
    %1088 = vmatprep.subr.mxu0 0.0
    %1089 = vmatpush2.msra.mxu0 0.0
    %1090 = vmatprep.subr.mxu0 0.0
    %1091 = vmatpush2.msra.mxu0 0.0
    %1092 = vmatprep.subr.mxu0 0.0
    %1093 = vmatpush2.msra.mxu0 0.0
    %1094 = vmatprep.subr.mxu0 0.0
    %1095 = vmatpush2.msra.mxu0 0.0
    %1096 = vmatprep.subr.mxu0 0.0
    %1097 = vmatpush2.msra.mxu0 0.0
    %1098 = vmatprep.subr.mxu0 0.0
    %1099 = vmatpush2.msra.mxu0 0.0
    %1100 = vmatprep.subr.mxu0 0.0
    %1101 = vmatpush2.msra.mxu0 0.0
    %1102 = vmatprep.subr.mxu0 0.0
    %1103 = vmatpush2.msra.mxu0 0.0
    %1104 = vmatprep.subr.mxu0 0.0
    %1105 = vmatpush2.msra.mxu0 0.0
    %1106 = vmatprep.mubr.f32.mxu0 0.0
    %1107 = vmatmul.mubr.f32.gmra.mxu0 %v673
    %v1108 = vpop.f32.mrf.mxu0
    %v1109 = vadd.f32 %v1032, %v1108
    %v1110 = vpop.f32.mrf.mxu0
    %v1111 = vadd.f32 %v1034, %v1110
    %1112 = vmatprep.mubr.f32.mxu0 0.0
    %1113 = vmatmul.mubr.f32.gmra.mxu0 %v676
    %v1114 = vpop.f32.mrf.mxu0
    %v1115 = vadd.f32 %v1038, %v1114
    %v1116 = vpop.f32.mrf.mxu0
    %v1117 = vadd.f32 %v1040, %v1116
    %1118 = vdwg.mxu0
    %1119 = vmatprep.subr.mxu0 %v770
    %1120 = vmatpush1.msra.mxu0 %v769
    %1121 = vmatprep.subr.mxu0 %v764
    %1122 = vmatpush1.msra.mxu0 %v763
    %1123 = vmatprep.subr.mxu0 %v758
    %1124 = vmatpush1.msra.mxu0 %v757
    %1125 = vmatprep.subr.mxu0 %v752
    %1126 = vmatpush1.msra.mxu0 %v751
    %1127 = vmatprep.subr.mxu0 %v746
    %1128 = vmatpush1.msra.mxu0 %v745
    %1129 = vmatprep.subr.mxu0 %v740
    %1130 = vmatpush1.msra.mxu0 %v739
    %1131 = vmatprep.subr.mxu0 %v734
    %1132 = vmatpush1.msra.mxu0 %v733
    %1133 = vmatprep.subr.mxu0 %v728
    %1134 = vmatpush1.msra.mxu0 %v727
    %1135 = vmatprep.subr.mxu0 %v722
    %1136 = vmatpush1.msra.mxu0 %v721
    %1137 = vmatprep.subr.mxu0 %v716
    %1138 = vmatpush1.msra.mxu0 %v715
    %1139 = vmatprep.subr.mxu0 %v710
    %1140 = vmatpush1.msra.mxu0 %v709
    %1141 = vmatprep.subr.mxu0 %v704
    %1142 = vmatpush1.msra.mxu0 %v703
    %1143 = vmatprep.subr.mxu0 %v698
    %1144 = vmatpush1.msra.mxu0 %v697
    %1145 = vmatprep.subr.mxu0 %v692
    %1146 = vmatpush1.msra.mxu0 %v691
    %1147 = vmatprep.subr.mxu0 %v686
    %1148 = vmatpush1.msra.mxu0 %v685
    %1149 = vmatprep.subr.mxu0 %v680
    %1150 = vmatpush1.msra.mxu0 %v679
    %1151 = vmatprep.subr.mxu0 %v866
    %1152 = vmatpush2.msra.mxu0 %v865
    %1153 = vmatprep.subr.mxu0 %v860
    %1154 = vmatpush2.msra.mxu0 %v859
    %1155 = vmatprep.subr.mxu0 %v854
    %1156 = vmatpush2.msra.mxu0 %v853
    %1157 = vmatprep.subr.mxu0 %v848
    %1158 = vmatpush2.msra.mxu0 %v847
    %1159 = vmatprep.subr.mxu0 %v842
    %1160 = vmatpush2.msra.mxu0 %v841
    %1161 = vmatprep.subr.mxu0 %v836
    %1162 = vmatpush2.msra.mxu0 %v835
    %1163 = vmatprep.subr.mxu0 %v830
    %1164 = vmatpush2.msra.mxu0 %v829
    %1165 = vmatprep.subr.mxu0 %v824
    %1166 = vmatpush2.msra.mxu0 %v823
    %1167 = vmatprep.subr.mxu0 %v818
    %1168 = vmatpush2.msra.mxu0 %v817
    %1169 = vmatprep.subr.mxu0 %v812
    %1170 = vmatpush2.msra.mxu0 %v811
    %1171 = vmatprep.subr.mxu0 %v806
    %1172 = vmatpush2.msra.mxu0 %v805
    %1173 = vmatprep.subr.mxu0 %v800
    %1174 = vmatpush2.msra.mxu0 %v799
    %1175 = vmatprep.subr.mxu0 %v794
    %1176 = vmatpush2.msra.mxu0 %v793
    %1177 = vmatprep.subr.mxu0 %v788
    %1178 = vmatpush2.msra.mxu0 %v787
    %1179 = vmatprep.subr.mxu0 %v782
    %1180 = vmatpush2.msra.mxu0 %v781
    %1181 = vmatprep.subr.mxu0 %v776
    %1182 = vmatpush2.msra.mxu0 %v775
    %1183 = vmatprep.mubr.f32.mxu0 %v672
    %1184 = vmatmul.mubr.f32.gmra.mxu0 %v671
    %v1185 = vpop.f32.mrf.mxu0
    %v1186 = vadd.f32 %v511, %v1185
    %v1187 = vpop.f32.mrf.mxu0
    %v1188 = vadd.f32 %v586, %v1187
    %1189 = vmatprep.mubr.f32.mxu0 %v675
    %1190 = vmatmul.mubr.f32.gmra.mxu0 %v674
    %v1191 = vpop.f32.mrf.mxu0
    %v1192 = vadd.f32 %v517, %v1191
    %v1193 = vpop.f32.mrf.mxu0
    %v1194 = vadd.f32 %v592, %v1193
    %1195 = vdwg.mxu0
    %1196 = vmatprep.subr.mxu0 %v962
    %1197 = vmatpush1.msra.mxu0 %v961
    %1198 = vmatprep.subr.mxu0 %v956
    %1199 = vmatpush1.msra.mxu0 %v955
    %1200 = vmatprep.subr.mxu0 %v950
    %1201 = vmatpush1.msra.mxu0 %v949
    %1202 = vmatprep.subr.mxu0 %v944
    %1203 = vmatpush1.msra.mxu0 %v943
    %1204 = vmatprep.subr.mxu0 %v938
    %1205 = vmatpush1.msra.mxu0 %v937
    %1206 = vmatprep.subr.mxu0 %v932
    %1207 = vmatpush1.msra.mxu0 %v931
    %1208 = vmatprep.subr.mxu0 %v926
    %1209 = vmatpush1.msra.mxu0 %v925
    %1210 = vmatprep.subr.mxu0 %v920
    %1211 = vmatpush1.msra.mxu0 %v919
    %1212 = vmatprep.subr.mxu0 %v914
    %1213 = vmatpush1.msra.mxu0 %v913
    %1214 = vmatprep.subr.mxu0 %v908
    %1215 = vmatpush1.msra.mxu0 %v907
    %1216 = vmatprep.subr.mxu0 %v902
    %1217 = vmatpush1.msra.mxu0 %v901
    %1218 = vmatprep.subr.mxu0 %v896
    %1219 = vmatpush1.msra.mxu0 %v895
    %1220 = vmatprep.subr.mxu0 %v890
    %1221 = vmatpush1.msra.mxu0 %v889
    %1222 = vmatprep.subr.mxu0 %v884
    %1223 = vmatpush1.msra.mxu0 %v883
    %1224 = vmatprep.subr.mxu0 %v878
    %1225 = vmatpush1.msra.mxu0 %v877
    %1226 = vmatprep.subr.mxu0 %v872
    %1227 = vmatpush1.msra.mxu0 %v871
    %1228 = vmatprep.subr.mxu0 0.0
    %1229 = vmatpush2.msra.mxu0 0.0
    %1230 = vmatprep.subr.mxu0 0.0
    %1231 = vmatpush2.msra.mxu0 0.0
    %1232 = vmatprep.subr.mxu0 0.0
    %1233 = vmatpush2.msra.mxu0 0.0
    %1234 = vmatprep.subr.mxu0 0.0
    %1235 = vmatpush2.msra.mxu0 0.0
    %1236 = vmatprep.subr.mxu0 0.0
    %1237 = vmatpush2.msra.mxu0 0.0
    %1238 = vmatprep.subr.mxu0 0.0
    %1239 = vmatpush2.msra.mxu0 0.0
    %1240 = vmatprep.subr.mxu0 0.0
    %1241 = vmatpush2.msra.mxu0 0.0
    %1242 = vmatprep.subr.mxu0 0.0
    %1243 = vmatpush2.msra.mxu0 0.0
    %1244 = vmatprep.subr.mxu0 0.0
    %1245 = vmatpush2.msra.mxu0 0.0
    %1246 = vmatprep.subr.mxu0 0.0
    %1247 = vmatpush2.msra.mxu0 0.0
    %1248 = vmatprep.subr.mxu0 0.0
    %1249 = vmatpush2.msra.mxu0 0.0
    %1250 = vmatprep.subr.mxu0 0.0
    %1251 = vmatpush2.msra.mxu0 0.0
    %1252 = vmatprep.subr.mxu0 0.0
    %1253 = vmatpush2.msra.mxu0 0.0
    %1254 = vmatprep.subr.mxu0 0.0
    %1255 = vmatpush2.msra.mxu0 0.0
    %1256 = vmatprep.subr.mxu0 0.0
    %1257 = vmatpush2.msra.mxu0 0.0
    %1258 = vmatprep.subr.mxu0 0.0
    %1259 = vmatpush2.msra.mxu0 0.0
    %1260 = vmatprep.mubr.f32.mxu0 0.0
    %1261 = vmatmul.mubr.f32.gmra.mxu0 %v673
    %v1262 = vpop.f32.mrf.mxu0
    %v1263 = vadd.f32 %v1186, %v1262
    %v1264 = vpop.f32.mrf.mxu0
    %v1265 = vadd.f32 %v1188, %v1264
    %1266 = vmatprep.mubr.f32.mxu0 0.0
    %1267 = vmatmul.mubr.f32.gmra.mxu0 %v676
    %v1268 = vpop.f32.mrf.mxu0
    %v1269 = vadd.f32 %v1192, %v1268
    %v1270 = vpop.f32.mrf.mxu0
    %v1271 = vadd.f32 %v1194, %v1270
    %1272 = vdwg.mxu0
    %1273 = vmatprep.subr.mxu0 %v772
    %1274 = vmatpush1.msra.mxu0 %v771
    %1275 = vmatprep.subr.mxu0 %v766
    %1276 = vmatpush1.msra.mxu0 %v765
    %1277 = vmatprep.subr.mxu0 %v760
    %1278 = vmatpush1.msra.mxu0 %v759
    %1279 = vmatprep.subr.mxu0 %v754
    %1280 = vmatpush1.msra.mxu0 %v753
    %1281 = vmatprep.subr.mxu0 %v748
    %1282 = vmatpush1.msra.mxu0 %v747
    %1283 = vmatprep.subr.mxu0 %v742
    %1284 = vmatpush1.msra.mxu0 %v741
    %1285 = vmatprep.subr.mxu0 %v736
    %1286 = vmatpush1.msra.mxu0 %v735
    %1287 = vmatprep.subr.mxu0 %v730
    %1288 = vmatpush1.msra.mxu0 %v729
    %1289 = vmatprep.subr.mxu0 %v724
    %1290 = vmatpush1.msra.mxu0 %v723
    %1291 = vmatprep.subr.mxu0 %v718
    %1292 = vmatpush1.msra.mxu0 %v717
    %1293 = vmatprep.subr.mxu0 %v712
    %1294 = vmatpush1.msra.mxu0 %v711
    %1295 = vmatprep.subr.mxu0 %v706
    %1296 = vmatpush1.msra.mxu0 %v705
    %1297 = vmatprep.subr.mxu0 %v700
    %1298 = vmatpush1.msra.mxu0 %v699
    %1299 = vmatprep.subr.mxu0 %v694
    %1300 = vmatpush1.msra.mxu0 %v693
    %1301 = vmatprep.subr.mxu0 %v688
    %1302 = vmatpush1.msra.mxu0 %v687
    %1303 = vmatprep.subr.mxu0 %v682
    %1304 = vmatpush1.msra.mxu0 %v681
    %1305 = vmatprep.subr.mxu0 %v868
    %1306 = vmatpush2.msra.mxu0 %v867
    %1307 = vmatprep.subr.mxu0 %v862
    %1308 = vmatpush2.msra.mxu0 %v861
    %1309 = vmatprep.subr.mxu0 %v856
    %1310 = vmatpush2.msra.mxu0 %v855
    %1311 = vmatprep.subr.mxu0 %v850
    %1312 = vmatpush2.msra.mxu0 %v849
    %1313 = vmatprep.subr.mxu0 %v844
    %1314 = vmatpush2.msra.mxu0 %v843
    %1315 = vmatprep.subr.mxu0 %v838
    %1316 = vmatpush2.msra.mxu0 %v837
    %1317 = vmatprep.subr.mxu0 %v832
    %1318 = vmatpush2.msra.mxu0 %v831
    %1319 = vmatprep.subr.mxu0 %v826
    %1320 = vmatpush2.msra.mxu0 %v825
    %1321 = vmatprep.subr.mxu0 %v820
    %1322 = vmatpush2.msra.mxu0 %v819
    %1323 = vmatprep.subr.mxu0 %v814
    %1324 = vmatpush2.msra.mxu0 %v813
    %1325 = vmatprep.subr.mxu0 %v808
    %1326 = vmatpush2.msra.mxu0 %v807
    %1327 = vmatprep.subr.mxu0 %v802
    %1328 = vmatpush2.msra.mxu0 %v801
    %1329 = vmatprep.subr.mxu0 %v796
    %1330 = vmatpush2.msra.mxu0 %v795
    %1331 = vmatprep.subr.mxu0 %v790
    %1332 = vmatpush2.msra.mxu0 %v789
    %1333 = vmatprep.subr.mxu0 %v784
    %1334 = vmatpush2.msra.mxu0 %v783
    %1335 = vmatprep.subr.mxu0 %v778
    %1336 = vmatpush2.msra.mxu0 %v777
    %1337 = vmatprep.mubr.f32.mxu0 %v672
    %1338 = vmatmul.mubr.f32.gmra.mxu0 %v671
    %v1339 = vpop.f32.mrf.mxu0
    %v1340 = vadd.f32 %v588, %v1339
    %v1341 = vpop.f32.mrf.mxu0
    %v1342 = vadd.f32 %v663, %v1341
    %1343 = vmatprep.mubr.f32.mxu0 %v675
    %1344 = vmatmul.mubr.f32.gmra.mxu0 %v674
    %v1345 = vpop.f32.mrf.mxu0
    %v1346 = vadd.f32 %v594, %v1345
    %v1347 = vpop.f32.mrf.mxu0
    %v1348 = vadd.f32 %v668, %v1347
    %1349 = vdwg.mxu0
    %1350 = vmatprep.subr.mxu0 %v964
    %1351 = vmatpush1.msra.mxu0 %v963
    %1352 = vmatprep.subr.mxu0 %v958
    %1353 = vmatpush1.msra.mxu0 %v957
    %1354 = vmatprep.subr.mxu0 %v952
    %1355 = vmatpush1.msra.mxu0 %v951
    %1356 = vmatprep.subr.mxu0 %v946
    %1357 = vmatpush1.msra.mxu0 %v945
    %1358 = vmatprep.subr.mxu0 %v940
    %1359 = vmatpush1.msra.mxu0 %v939
    %1360 = vmatprep.subr.mxu0 %v934
    %1361 = vmatpush1.msra.mxu0 %v933
    %1362 = vmatprep.subr.mxu0 %v928
    %1363 = vmatpush1.msra.mxu0 %v927
    %1364 = vmatprep.subr.mxu0 %v922
    %1365 = vmatpush1.msra.mxu0 %v921
    %1366 = vmatprep.subr.mxu0 %v916
    %1367 = vmatpush1.msra.mxu0 %v915
    %1368 = vmatprep.subr.mxu0 %v910
    %1369 = vmatpush1.msra.mxu0 %v909
    %1370 = vmatprep.subr.mxu0 %v904
    %1371 = vmatpush1.msra.mxu0 %v903
    %1372 = vmatprep.subr.mxu0 %v898
    %1373 = vmatpush1.msra.mxu0 %v897
    %1374 = vmatprep.subr.mxu0 %v892
    %1375 = vmatpush1.msra.mxu0 %v891
    %1376 = vmatprep.subr.mxu0 %v886
    %1377 = vmatpush1.msra.mxu0 %v885
    %1378 = vmatprep.subr.mxu0 %v880
    %1379 = vmatpush1.msra.mxu0 %v879
    %1380 = vmatprep.subr.mxu0 %v874
    %1381 = vmatpush1.msra.mxu0 %v873
    %1382 = vmatprep.subr.mxu0 0.0
    %1383 = vmatpush2.msra.mxu0 0.0
    %1384 = vmatprep.subr.mxu0 0.0
    %1385 = vmatpush2.msra.mxu0 0.0
    %1386 = vmatprep.subr.mxu0 0.0
    %1387 = vmatpush2.msra.mxu0 0.0
    %1388 = vmatprep.subr.mxu0 0.0
    %1389 = vmatpush2.msra.mxu0 0.0
    %1390 = vmatprep.subr.mxu0 0.0
    %1391 = vmatpush2.msra.mxu0 0.0
    %1392 = vmatprep.subr.mxu0 0.0
    %1393 = vmatpush2.msra.mxu0 0.0
    %1394 = vmatprep.subr.mxu0 0.0
    %1395 = vmatpush2.msra.mxu0 0.0
    %1396 = vmatprep.subr.mxu0 0.0
    %1397 = vmatpush2.msra.mxu0 0.0
    %1398 = vmatprep.subr.mxu0 0.0
    %1399 = vmatpush2.msra.mxu0 0.0
    %1400 = vmatprep.subr.mxu0 0.0
    %1401 = vmatpush2.msra.mxu0 0.0
    %1402 = vmatprep.subr.mxu0 0.0
    %1403 = vmatpush2.msra.mxu0 0.0
    %1404 = vmatprep.subr.mxu0 0.0
    %1405 = vmatpush2.msra.mxu0 0.0
    %1406 = vmatprep.subr.mxu0 0.0
    %1407 = vmatpush2.msra.mxu0 0.0
    %1408 = vmatprep.subr.mxu0 0.0
    %1409 = vmatpush2.msra.mxu0 0.0
    %1410 = vmatprep.subr.mxu0 0.0
    %1411 = vmatpush2.msra.mxu0 0.0
    %1412 = vmatprep.subr.mxu0 0.0
    %1413 = vmatpush2.msra.mxu0 0.0
    %1414 = vmatprep.mubr.f32.mxu0 0.0
    %1415 = vmatmul.mubr.f32.gmra.mxu0 %v673
    %v1416 = vpop.f32.mrf.mxu0
    %v1417 = vadd.f32 %v1340, %v1416
    %v1418 = vpop.f32.mrf.mxu0
    %v1419 = vadd.f32 %v1342, %v1418
    %1420 = vmatprep.mubr.f32.mxu0 0.0
    %1421 = vmatmul.mubr.f32.gmra.mxu0 %v676
    %v1422 = vpop.f32.mrf.mxu0
    %v1423 = vadd.f32 %v1346, %v1422
    %v1424 = vpop.f32.mrf.mxu0
    %v1425 = vadd.f32 %v1348, %v1424
    %1426 = vdwg.mxu0
    %1427 = vst [vmem:[%s3] sm:$0xff] %v1109
    %1428 = vst [vmem:[%s3 + $0x8] sm:$0xff] %v1111
    %1429 = vst [vmem:[%s3 + $0x10] sm:$0xff] %v1263
    %1430 = vst [vmem:[%s3 + $0x18] sm:$0xff] %v1265
    %1431 = vst [vmem:[%s3 + $0x20] sm:$0xff] %v1417
    %1432 = vst [vmem:[%s3 + $0x28] sm:$0xff] %v1419
    %1433 = vst [vmem:[%s3 + $0x30] sm:$0xf] %v1115
    %1434 = vst [vmem:[%s3 + $0x38] sm:$0xf] %v1117
    %1435 = vst [vmem:[%s3 + $0x40] sm:$0xf] %v1269
    %1436 = vst [vmem:[%s3 + $0x48] sm:$0xf] %v1271
    %1437 = vst [vmem:[%s3 + $0x50] sm:$0xf] %v1423
    %1438 = vst [vmem:[%s3 + $0x58] sm:$0xf] %v1425
    // Predicated region
    $region22: #{critic_att_combine_forward.1} parent=1 // pred_check
      _
    $region23: #{critic_att_combine_forward.1} parent=1 // pred_check_branch
      %1440 = sbr.rel (0) target = $region25
    $region24: #{critic_att_combine_forward.1} parent=1 // pred_region
      _
    $region25: #{critic_att_combine_forward.1} parent=1 // pred_fallthru
      _
    // Predicated region
    $region26: #{critic_att_combine_forward.1} parent=1 // pred_check
      _
    $region27: #{critic_att_combine_forward.1} parent=1 // pred_check_branch
      %1442 = sbr.rel (0) target = $region29
    $region28: #{critic_att_combine_forward.1} parent=1 // pred_region
      _
    $region29: #{critic_att_combine_forward.1} parent=1 // pred_fallthru
      _
    %1443 = vsyncpa [#allocation3], 1
    %1444 = vsyncpa [#allocation5], 1

</llo_original>
